<compile_context>
chip_gen: v5e
topology: v5e:2x2
jax: 0.10.0
libtpu: 0.0.40
codegen_flags: <defaults>
</compile_context>

<pallas_src>
from functools import partial

import jax
import jax.numpy as jnp
from jax.experimental import pallas as pl
from jax.experimental.pallas import tpu as pltpu


def _round_up(x, m):
    return (x + m - 1) // m * m


# ------------------------------- Pallas kernel -------------------------------

def _fused_temporal_block_kernel(x_ref, w1_ref, b1_ref, w2_ref, b2_ref, *rest,
                                 k, dilation, tile_l, pad, has_downsample):
    # x_ref : (tile_l + 2*pad, Cin_p)  halo'd x tile (row m ~ global x index
    #                                  j*tile_l - 2*pad + m; negative indices are zeros)
    # w1_ref: (k, Cin_p,  Cout_p)      weight-normed conv1 weights
    # b1_ref: (1, Cout_p)              f32
    # w2_ref: (k, Cout_p, Cout_p)      weight-normed conv2 weights
    # b2_ref: (1, Cout_p)              f32
    # rest  : [wds_ref (1,Cin_p,Cout_p), bds_ref (1,Cout_p)] if has_downsample,
    #         out_ref (Cout_p, tile_l), h1_ref scratch (tile_l + pad, Cout_p)
    if has_downsample:
        wds_ref, bds_ref, out_ref, h1_ref = rest
    else:
        out_ref, h1_ref = rest

    j = pl.program_id(1)
    H = tile_l + pad                      # h1 rows needed for this tile (incl. halo)

    # ---- conv1 (causal, dilated) as k accumulated MXU dots; f32 accumulation ----
    acc1 = jnp.dot(x_ref[0:H, :], w1_ref[0], preferred_element_type=jnp.float32)
    for i in range(1, k):
        off = i * dilation                # static offset
        acc1 = acc1 + jnp.dot(x_ref[off:off + H, :], w1_ref[i],
                              preferred_element_type=jnp.float32)
    h1 = jnp.maximum(acc1 + b1_ref[0, :][None, :], 0.0)   # bias + relu1 (f32)
    h1_ref[...] = h1.astype(h1_ref.dtype)

    # h1 rows whose global index is < 0 stand in for conv2's zero left padding
    # (they must be exactly 0, not relu(b1)). Only the first ceil(pad/tile_l)
    # tiles are affected -> gate the full-tile select.
    @pl.when(j * tile_l < pad)
    def _():
        row = jax.lax.broadcasted_iota(jnp.int32, (H, 1), 0)
        h1_ref[...] = jnp.where(row + j * tile_l < pad, 0.0,
                                h1_ref[...]).astype(h1_ref.dtype)

    # ---- conv2 (causal, dilated): k accumulated dots straight from the scratch ----
    acc2 = jnp.dot(h1_ref[0:tile_l, :], w2_ref[0], preferred_element_type=jnp.float32)
    for i in range(1, k):
        off = i * dilation                # static offset
        acc2 = acc2 + jnp.dot(h1_ref[off:off + tile_l, :], w2_ref[i],
                              preferred_element_type=jnp.float32)
    out2 = jnp.maximum(acc2 + b2_ref[0, :][None, :], 0.0)  # bias + relu2 (part of net)

    # ---- residual path: identity or fused 1x1 downsample ----
    x_res = x_ref[2 * pad:2 * pad + tile_l, :]
    if has_downsample:
        res = jnp.dot(x_res, wds_ref[0], preferred_element_type=jnp.float32)
        res = res + bds_ref[0, :][None, :]
    else:
        res = x_res.astype(jnp.float32)

    y = jnp.maximum(out2 + res, 0.0)                        # final relu

    # Emit in final (C, L) layout: XLU transpose; lane dim = tile_l (lane-dense store).
    out_ref[...] = jnp.transpose(y).astype(out_ref.dtype)


# ------------------------------- host wrapper --------------------------------

def weight_norm_eff(v, g):
    """weight_norm with dim=None: w = g * v / ||v||_F (scalar g)."""
    return g * v / jnp.sqrt(jnp.sum(v * v))


def temporal_block_forward(x_ncl, params, *, kernel_size, dilation, padding,
                           tile_l=512, compute_dtype=jnp.bfloat16, out_dtype=None):
    """Forward pass of TemporalBlock. x_ncl: (N, C_in, L) as in PyTorch."""
    k = kernel_size
    assert padding == (k - 1) * dilation, "TCN uses causal padding = (k-1)*dilation"
    pad = padding

    N, C_in, L = x_ncl.shape
    C_out = params["v1"].shape[-1]
    has_downsample = params.get("w_ds") is not None
    if not has_downsample:
        assert C_in == C_out
    if out_dtype is None:
        out_dtype = x_ncl.dtype

    # weight_norm in f32, then cast to the compute dtype
    w1 = weight_norm_eff(params["v1"].astype(jnp.float32),
                         params["g1"].astype(jnp.float32))   # (k, Cin,  Cout)
    w2 = weight_norm_eff(params["v2"].astype(jnp.float32),
                         params["g2"].astype(jnp.float32))   # (k, Cout, Cout)

    # ---- TPU-friendly padding / layout ----
    cin_p = _round_up(C_in, 128)
    cout_p = _round_up(C_out, 128)

    tile_l = max(128, min(_round_up(tile_l, 128), _round_up(L, 128)))
    n_tiles = pl.cdiv(L, tile_l)
    L_p = n_tiles * tile_l
    win = tile_l + 2 * pad                # per-tile x window (incl. causal halo)

    # channels-last, 2*pad causal zeros on the left, right pad to L_p, lane-dense C.
    # NOTE: transpose+pad+cast+unfold is one host-side pass over x; the gather below
    # produces the halo'd per-tile layout consumed by the kernel's BlockSpec.
    x = jnp.transpose(x_ncl, (0, 2, 1)).astype(compute_dtype)           # (N, L, Cin)
    x_e = jnp.pad(x, ((0, 0), (2 * pad, L_p - L), (0, cin_p - C_in)))   # (N, L_p+2*pad, cin_p)
    idx = (jnp.arange(n_tiles, dtype=jnp.int32)[:, None] * tile_l
           + jnp.arange(win, dtype=jnp.int32)[None, :])
    x_unf = jnp.take(x_e, idx, axis=1)                                  # (N, n_tiles, win, cin_p)

    def pad_conv_w(w, ci, co):
        return jnp.pad(w, ((0, 0), (0, ci - w.shape[1]),
                           (0, co - w.shape[2]))).astype(compute_dtype)

    def pad_bias(b, co):
        return jnp.pad(b, (0, co - b.shape[0])).reshape(1, co).astype(jnp.float32)

    w1_p = pad_conv_w(w1, cin_p, cout_p)          # (k, cin_p,  cout_p)
    w2_p = pad_conv_w(w2, cout_p, cout_p)         # (k, cout_p, cout_p)
    b1_p = pad_bias(params["b1"], cout_p)
    b2_p = pad_bias(params["b2"], cout_p)

    in_specs = [
        pl.BlockSpec((None, None, win, cin_p), lambda b, j: (b, j, 0, 0)),   # x (halo'd tile)
        pl.BlockSpec((k, cin_p, cout_p), lambda b, j: (0, 0, 0)),            # w1
        pl.BlockSpec((1, cout_p), lambda b, j: (0, 0)),                      # b1
        pl.BlockSpec((k, cout_p, cout_p), lambda b, j: (0, 0, 0)),           # w2
        pl.BlockSpec((1, cout_p), lambda b, j: (0, 0)),                      # b2
    ]
    args = [x_unf, w1_p, b1_p, w2_p, b2_p]

    if has_downsample:
        wds_p = jnp.pad(params["w_ds"],
                        ((0, 0), (0, cin_p - C_in), (0, cout_p - C_out))
                        ).astype(compute_dtype)                              # (1, cin_p, cout_p)
        bds_p = pad_bias(params["b_ds"], cout_p)
        in_specs += [
            pl.BlockSpec((1, cin_p, cout_p), lambda b, j: (0, 0, 0)),
            pl.BlockSpec((1, cout_p), lambda b, j: (0, 0)),
        ]
        args += [wds_p, bds_p]

    # VMEM budget from the actual buffer sizes (double-buffered in/out + scratch),
    # capped per TPU generation (v7x has only 64 MiB of VMEM).
    item = jnp.dtype(compute_dtype).itemsize
    o_item = jnp.dtype(out_dtype).itemsize
    needed = 2 * (win * cin_p * item
                  + k * cin_p * cout_p * item + k * cout_p * cout_p * item
                  + 2 * cout_p * 4
                  + ((cin_p * cout_p * item + cout_p * 4) if has_downsample else 0)
                  + cout_p * tile_l * o_item) \
        + (tile_l + pad) * cout_p * item
    try:
        cap = int(pltpu.get_tpu_info().vmem_capacity_bytes)
    except Exception:
        cap = 64 * 1024 * 1024
    vmem_limit = int(min(max(2 * needed, 32 * 1024 * 1024), int(0.6 * cap)))

    kern = partial(_fused_temporal_block_kernel, k=k, dilation=dilation,
                   tile_l=tile_l, pad=pad, has_downsample=has_downsample)

    out = pl.pallas_call(
        kern,
        out_shape=jax.ShapeDtypeStruct((N, cout_p, L_p), out_dtype),
        grid=(N, n_tiles),
        in_specs=in_specs,
        out_specs=pl.BlockSpec((None, cout_p, tile_l), lambda b, j: (b, 0, j)),
        scratch_shapes=[pltpu.VMEM((tile_l + pad, cout_p), compute_dtype)],
        compiler_params=pltpu.CompilerParams(
            dimension_semantics=("parallel", "parallel"),
            vmem_limit_bytes=vmem_limit,
        ),
    )(*args)

    # Output is already (N, C, L): just drop channel / length padding.
    return out[:, :C_out, :L]


# ------------------------------ pure-JAX reference ---------------------------

def _ref_causal_conv(x_nlc, w, b, dilation):
    k = w.shape[0]
    L = x_nlc.shape[1]
    pad = (k - 1) * dilation
    xp = jnp.pad(x_nlc, ((0, 0), (pad, 0), (0, 0)))
    y = sum(jnp.einsum("blc,co->blo", xp[:, i * dilation:i * dilation + L, :], w[i])
            for i in range(k))
    return y + b


def ref_forward(x_ncl, params, *, dilation):
    x = jnp.transpose(x_ncl, (0, 2, 1))
    w1 = weight_norm_eff(params["v1"], params["g1"])
    w2 = weight_norm_eff(params["v2"], params["g2"])
    h1 = jax.nn.relu(_ref_causal_conv(x, w1, params["b1"], dilation))
    out2 = jax.nn.relu(_ref_causal_conv(h1, w2, params["b2"], dilation))   # relu2 in net
    res = (x if params.get("w_ds") is None
           else _ref_causal_conv(x, params["w_ds"], params["b_ds"], 1))
    y = jax.nn.relu(out2 + res)
    return jnp.transpose(y, (0, 2, 1))


# ----------------------------------- main ------------------------------------

if __name__ == "__main__":
    # TemporalBlock(n_inputs=4, n_outputs=8, kernel_size=3, stride=1, dilation=2,
    #               padding=(3-1)*2=4)
    N, C_IN, C_OUT, L = 2, 4, 8, 16
    K, DIL = 3, 2
    PAD = (K - 1) * DIL

    key = jax.random.PRNGKey(0)
    keys = jax.random.split(key, 10)

    v1 = 0.01 * jax.random.normal(keys[0], (K, C_IN, C_OUT), jnp.float32)
    g1 = jnp.float32(1.0) + 0.1 * jax.random.normal(keys[1], ())
    b1 = 0.05 * jax.random.normal(keys[2], (C_OUT,), jnp.float32)

    v2 = 0.01 * jax.random.normal(keys[3], (K, C_OUT, C_OUT), jnp.float32)
    g2 = jnp.float32(1.0) + 0.1 * jax.random.normal(keys[4], ())
    b2 = 0.05 * jax.random.normal(keys[5], (C_OUT,), jnp.float32)

    # downsample exists because n_inputs != n_outputs
    w_ds = 0.01 * jax.random.normal(keys[6], (1, C_IN, C_OUT), jnp.float32)
    b_ds = 0.05 * jax.random.normal(keys[7], (C_OUT,), jnp.float32)

    params = dict(v1=v1, g1=g1, b1=b1, v2=v2, g2=g2, b2=b2, w_ds=w_ds, b_ds=b_ds)

    x = jax.random.normal(keys[8], (N, C_IN, L), jnp.float32)   # PyTorch NCL layout

    y_ref = ref_forward(x, params, dilation=DIL)

    # f32 compute path (exact-ish check)
    y = temporal_block_forward(x, params, kernel_size=K, dilation=DIL, padding=PAD,
                               compute_dtype=jnp.float32)
    y = jax.block_until_ready(y)
    assert y.shape == (N, C_OUT, L)
    assert jnp.allclose(y, y_ref, atol=2e-4, rtol=2e-4), "f32 mismatch vs reference"

    # bf16 compute path (default on v6e/v7x: bf16-native MXU, halved VMEM/HBM traffic)
    y_bf16 = temporal_block_forward(x, params, kernel_size=K, dilation=DIL, padding=PAD,
                                    compute_dtype=jnp.bfloat16)
    y_bf16 = jax.block_until_ready(y_bf16)
    assert jnp.allclose(y_bf16, y_ref, atol=2e-2, rtol=2e-2), "bf16 mismatch vs reference"

    # identity-residual variant (n_inputs == n_outputs, no downsample conv)
    v1b = 0.01 * jax.random.normal(keys[9], (K, C_OUT, C_OUT), jnp.float32)
    params_id = dict(v1=v1b, g1=g1, b1=b1, v2=v2, g2=g2, b2=b2, w_ds=None, b_ds=None)
    x2 = jax.random.normal(keys[8], (N, C_OUT, L), jnp.float32)
    y_ref2 = ref_forward(x2, params_id, dilation=DIL)
    y2 = temporal_block_forward(x2, params_id, kernel_size=K, dilation=DIL, padding=PAD,
                                compute_dtype=jnp.float32)
    y2 = jax.block_until_ready(y2)
    assert jnp.allclose(y2, y_ref2, atol=2e-4, rtol=2e-4), "identity-residual mismatch"

    print("KERNEL_OK")
</pallas_src>

<mosaic_0001>
module attributes {stable_mosaic.version = 11 : i64} {
  func.func @_fused_temporal_block_kernel(%arg0: i32, %arg1: i32, %arg2: memref<1x1x136x128xf32, #tpu.memory_space<vmem>>, %arg3: memref<3x128x128xf32, #tpu.memory_space<vmem>>, %arg4: memref<1x128xf32, #tpu.memory_space<vmem>>, %arg5: memref<3x128x128xf32, #tpu.memory_space<vmem>>, %arg6: memref<1x128xf32, #tpu.memory_space<vmem>>, %arg7: memref<1x128x128xf32, #tpu.memory_space<vmem>>, %arg8: memref<1x128xf32, #tpu.memory_space<vmem>>, %arg9: memref<1x128x128xf32, #tpu.memory_space<vmem>>, %arg10: memref<132x128xf32, #tpu.memory_space<vmem>>) attributes {dimension_semantics = [#tpu.dimension_semantics<parallel>, #tpu.dimension_semantics<parallel>], iteration_bounds = array<i64: 2, 1>, scalar_prefetch = 0 : i64, scratch_operands = 1 : i64, tpu.core_type = #tpu.core_type<tc>, window_params = [{transform_indices = @transform_0, window_bounds = array<i64: 1, 1, 136, 128>}, {pipeline_mode = #tpu.pipeline_mode<synchronous>, transform_indices = @transform_1, window_bounds = array<i64: 3, 128, 128>}, {pipeline_mode = #tpu.pipeline_mode<synchronous>, transform_indices = @transform_2, window_bounds = array<i64: 1, 128>}, {pipeline_mode = #tpu.pipeline_mode<synchronous>, transform_indices = @transform_3, window_bounds = array<i64: 3, 128, 128>}, {pipeline_mode = #tpu.pipeline_mode<synchronous>, transform_indices = @transform_4, window_bounds = array<i64: 1, 128>}, {pipeline_mode = #tpu.pipeline_mode<synchronous>, transform_indices = @transform_5, window_bounds = array<i64: 1, 128, 128>}, {pipeline_mode = #tpu.pipeline_mode<synchronous>, transform_indices = @transform_6, window_bounds = array<i64: 1, 128>}, {transform_indices = @transform_7, window_bounds = array<i64: 1, 128, 128>}]} {
    %c0 = arith.constant 0 : index
    %c0_0 = arith.constant 0 : index
    %c0_1 = arith.constant 0 : index
    %c0_2 = arith.constant 0 : index
    %0 = vector.load %arg2[%c0, %c0_0, %c0_1, %c0_2] : memref<1x1x136x128xf32, #tpu.memory_space<vmem>>, vector<1x1x132x128xf32>
    %1 = vector.shape_cast %0 : vector<1x1x132x128xf32> to vector<132x128xf32>
    %c0_3 = arith.constant 0 : index
    %c0_4 = arith.constant 0 : index
    %c0_5 = arith.constant 0 : index
    %2 = vector.load %arg3[%c0_3, %c0_4, %c0_5] : memref<3x128x128xf32, #tpu.memory_space<vmem>>, vector<1x128x128xf32>
    %3 = vector.shape_cast %2 : vector<1x128x128xf32> to vector<128x128xf32>
    %cst = arith.constant dense<0.000000e+00> : vector<132x128xf32>
    %4 = tpu.matmul %1, %3, %cst {dimension_numbers = #tpu.dot_dimension_numbers<[1], [0], [0], [1], [0, 0, 1, 1], [], []>} : vector<132x128xf32>, vector<128x128xf32>, vector<132x128xf32> -> vector<132x128xf32>
    %c0_6 = arith.constant 0 : index
    %c0_7 = arith.constant 0 : index
    %c2 = arith.constant 2 : index
    %c0_8 = arith.constant 0 : index
    %5 = vector.load %arg2[%c0_6, %c0_7, %c2, %c0_8] : memref<1x1x136x128xf32, #tpu.memory_space<vmem>>, vector<1x1x132x128xf32>
    %6 = vector.shape_cast %5 : vector<1x1x132x128xf32> to vector<132x128xf32>
    %c1 = arith.constant 1 : index
    %c0_9 = arith.constant 0 : index
    %c0_10 = arith.constant 0 : index
    %7 = vector.load %arg3[%c1, %c0_9, %c0_10] : memref<3x128x128xf32, #tpu.memory_space<vmem>>, vector<1x128x128xf32>
    %8 = vector.shape_cast %7 : vector<1x128x128xf32> to vector<128x128xf32>
    %cst_11 = arith.constant dense<0.000000e+00> : vector<132x128xf32>
    %9 = tpu.matmul %6, %8, %cst_11 {dimension_numbers = #tpu.dot_dimension_numbers<[1], [0], [0], [1], [0, 0, 1, 1], [], []>} : vector<132x128xf32>, vector<128x128xf32>, vector<132x128xf32> -> vector<132x128xf32>
    %10 = arith.addf %4, %9 : vector<132x128xf32>
    %c0_12 = arith.constant 0 : index
    %c0_13 = arith.constant 0 : index
    %c4 = arith.constant 4 : index
    %c0_14 = arith.constant 0 : index
    %11 = vector.load %arg2[%c0_12, %c0_13, %c4, %c0_14] : memref<1x1x136x128xf32, #tpu.memory_space<vmem>>, vector<1x1x132x128xf32>
    %12 = vector.shape_cast %11 : vector<1x1x132x128xf32> to vector<132x128xf32>
    %c2_15 = arith.constant 2 : index
    %c0_16 = arith.constant 0 : index
    %c0_17 = arith.constant 0 : index
    %13 = vector.load %arg3[%c2_15, %c0_16, %c0_17] : memref<3x128x128xf32, #tpu.memory_space<vmem>>, vector<1x128x128xf32>
    %14 = vector.shape_cast %13 : vector<1x128x128xf32> to vector<128x128xf32>
    %cst_18 = arith.constant dense<0.000000e+00> : vector<132x128xf32>
    %15 = tpu.matmul %12, %14, %cst_18 {dimension_numbers = #tpu.dot_dimension_numbers<[1], [0], [0], [1], [0, 0, 1, 1], [], []>} : vector<132x128xf32>, vector<128x128xf32>, vector<132x128xf32> -> vector<132x128xf32>
    %16 = arith.addf %10, %15 : vector<132x128xf32>
    %c0_19 = arith.constant 0 : index
    %c0_20 = arith.constant 0 : index
    %17 = vector.load %arg4[%c0_19, %c0_20] : memref<1x128xf32, #tpu.memory_space<vmem>>, vector<1x128xf32>
    %18 = vector.shape_cast %17 : vector<1x128xf32> to vector<128xf32>
    %19 = vector.shape_cast %18 : vector<128xf32> to vector<1x128xf32>
    %20 = vector.broadcast %19 : vector<1x128xf32> to vector<132x128xf32>
    %21 = arith.addf %16, %20 : vector<132x128xf32>
    %cst_21 = arith.constant 0.000000e+00 : f32
    %22 = vector.broadcast %cst_21 : f32 to vector<132x128xf32>
    %23 = arith.maximumf %21, %22 : vector<132x128xf32>
    %c0_22 = arith.constant 0 : index
    %c0_23 = arith.constant 0 : index
    %24 = vector.load %arg10[%c0_22, %c0_23] : memref<132x128xf32, #tpu.memory_space<vmem>>, vector<132x128xf32>
    tpu.vector_store %arg10[%c0_22, %c0_23], %23 {strides = array<i32>} : memref<132x128xf32, #tpu.memory_space<vmem>>, vector<132x128xf32>,
    %c128_i32 = arith.constant 128 : i32
    %25 = arith.muli %arg1, %c128_i32 : i32
    %c4_i32 = arith.constant 4 : i32
    %26 = arith.cmpi slt, %25, %c4_i32 : i32
    %27 = arith.extui %26 : i1 to i32
    %c0_i32 = arith.constant 0 : i32
    %28 = arith.cmpi ne, %27, %c0_i32 : i32
    scf.if %28 {
      %67 = tpu.iota {dimensions = array<i32: 0>} : vector<132x1xi32>
      %c128_i32_58 = arith.constant 128 : i32
      %68 = arith.muli %arg1, %c128_i32_58 : i32
      %69 = vector.broadcast %68 : i32 to vector<132x1xi32>
      %70 = arith.addi %67, %69 : vector<132x1xi32>
      %c4_i32_59 = arith.constant 4 : i32
      %71 = vector.broadcast %c4_i32_59 : i32 to vector<132x1xi32>
      %72 = arith.cmpi slt, %70, %71 : vector<132x1xi32>
      %c0_60 = arith.constant 0 : index
      %c0_61 = arith.constant 0 : index
      %73 = vector.load %arg10[%c0_60, %c0_61] : memref<132x128xf32, #tpu.memory_space<vmem>>, vector<132x128xf32>
      %cst_62 = arith.constant 0.000000e+00 : f32
      %74 = vector.shape_cast %72 : vector<132x1xi1> to vector<132x1xi1>
      %75 = vector.broadcast %74 : vector<132x1xi1> to vector<132x128xi1>
      %76 = vector.broadcast %cst_62 : f32 to vector<132x128xf32>
      %77 = arith.select %75, %76, %73 : vector<132x128xi1>, vector<132x128xf32>
      %c0_63 = arith.constant 0 : index
      %c0_64 = arith.constant 0 : index
      %78 = vector.load %arg10[%c0_63, %c0_64] : memref<132x128xf32, #tpu.memory_space<vmem>>, vector<132x128xf32>
      tpu.vector_store %arg10[%c0_63, %c0_64], %77 {strides = array<i32>} : memref<132x128xf32, #tpu.memory_space<vmem>>, vector<132x128xf32>,
    } else {
    }
    %c0_24 = arith.constant 0 : index
    %c0_25 = arith.constant 0 : index
    %29 = vector.load %arg10[%c0_24, %c0_25] : memref<132x128xf32, #tpu.memory_space<vmem>>, vector<128x128xf32>
    %c0_26 = arith.constant 0 : index
    %c0_27 = arith.constant 0 : index
    %c0_28 = arith.constant 0 : index
    %30 = vector.load %arg5[%c0_26, %c0_27, %c0_28] : memref<3x128x128xf32, #tpu.memory_space<vmem>>, vector<1x128x128xf32>
    %31 = vector.shape_cast %30 : vector<1x128x128xf32> to vector<128x128xf32>
    %cst_29 = arith.constant dense<0.000000e+00> : vector<128x128xf32>
    %32 = tpu.matmul %29, %31, %cst_29 {dimension_numbers = #tpu.dot_dimension_numbers<[1], [0], [0], [1], [0, 0, 1, 1], [], []>} : vector<128x128xf32>, vector<128x128xf32>, vector<128x128xf32> -> vector<128x128xf32>
    %c2_30 = arith.constant 2 : index
    %c0_31 = arith.constant 0 : index
    %33 = vector.load %arg10[%c2_30, %c0_31] : memref<132x128xf32, #tpu.memory_space<vmem>>, vector<128x128xf32>
    %c1_32 = arith.constant 1 : index
    %c0_33 = arith.constant 0 : index
    %c0_34 = arith.constant 0 : index
    %34 = vector.load %arg5[%c1_32, %c0_33, %c0_34] : memref<3x128x128xf32, #tpu.memory_space<vmem>>, vector<1x128x128xf32>
    %35 = vector.shape_cast %34 : vector<1x128x128xf32> to vector<128x128xf32>
    %cst_35 = arith.constant dense<0.000000e+00> : vector<128x128xf32>
    %36 = tpu.matmul %33, %35, %cst_35 {dimension_numbers = #tpu.dot_dimension_numbers<[1], [0], [0], [1], [0, 0, 1, 1], [], []>} : vector<128x128xf32>, vector<128x128xf32>, vector<128x128xf32> -> vector<128x128xf32>
    %37 = arith.addf %32, %36 : vector<128x128xf32>
    %c4_36 = arith.constant 4 : index
    %c0_37 = arith.constant 0 : index
    %38 = vector.load %arg10[%c4_36, %c0_37] : memref<132x128xf32, #tpu.memory_space<vmem>>, vector<128x128xf32>
    %c2_38 = arith.constant 2 : index
    %c0_39 = arith.constant 0 : index
    %c0_40 = arith.constant 0 : index
    %39 = vector.load %arg5[%c2_38, %c0_39, %c0_40] : memref<3x128x128xf32, #tpu.memory_space<vmem>>, vector<1x128x128xf32>
    %40 = vector.shape_cast %39 : vector<1x128x128xf32> to vector<128x128xf32>
    %cst_41 = arith.constant dense<0.000000e+00> : vector<128x128xf32>
    %41 = tpu.matmul %38, %40, %cst_41 {dimension_numbers = #tpu.dot_dimension_numbers<[1], [0], [0], [1], [0, 0, 1, 1], [], []>} : vector<128x128xf32>, vector<128x128xf32>, vector<128x128xf32> -> vector<128x128xf32>
    %42 = arith.addf %37, %41 : vector<128x128xf32>
    %c0_42 = arith.constant 0 : index
    %c0_43 = arith.constant 0 : index
    %43 = vector.load %arg6[%c0_42, %c0_43] : memref<1x128xf32, #tpu.memory_space<vmem>>, vector<1x128xf32>
    %44 = vector.shape_cast %43 : vector<1x128xf32> to vector<128xf32>
    %45 = vector.shape_cast %44 : vector<128xf32> to vector<1x128xf32>
    %46 = vector.broadcast %45 : vector<1x128xf32> to vector<128x128xf32>
    %47 = arith.addf %42, %46 : vector<128x128xf32>
    %cst_44 = arith.constant 0.000000e+00 : f32
    %48 = vector.broadcast %cst_44 : f32 to vector<128x128xf32>
    %49 = arith.maximumf %47, %48 : vector<128x128xf32>
    %c0_45 = arith.constant 0 : index
    %c0_46 = arith.constant 0 : index
    %c8 = arith.constant 8 : index
    %c0_47 = arith.constant 0 : index
    %50 = vector.load %arg2[%c0_45, %c0_46, %c8, %c0_47] : memref<1x1x136x128xf32, #tpu.memory_space<vmem>>, vector<1x1x128x128xf32>
    %51 = vector.shape_cast %50 : vector<1x1x128x128xf32> to vector<128x128xf32>
    %c0_48 = arith.constant 0 : index
    %c0_49 = arith.constant 0 : index
    %c0_50 = arith.constant 0 : index
    %52 = vector.load %arg7[%c0_48, %c0_49, %c0_50] : memref<1x128x128xf32, #tpu.memory_space<vmem>>, vector<1x128x128xf32>
    %53 = vector.shape_cast %52 : vector<1x128x128xf32> to vector<128x128xf32>
    %cst_51 = arith.constant dense<0.000000e+00> : vector<128x128xf32>
    %54 = tpu.matmul %51, %53, %cst_51 {dimension_numbers = #tpu.dot_dimension_numbers<[1], [0], [0], [1], [0, 0, 1, 1], [], []>} : vector<128x128xf32>, vector<128x128xf32>, vector<128x128xf32> -> vector<128x128xf32>
    %c0_52 = arith.constant 0 : index
    %c0_53 = arith.constant 0 : index
    %55 = vector.load %arg8[%c0_52, %c0_53] : memref<1x128xf32, #tpu.memory_space<vmem>>, vector<1x128xf32>
    %56 = vector.shape_cast %55 : vector<1x128xf32> to vector<128xf32>
    %57 = vector.shape_cast %56 : vector<128xf32> to vector<1x128xf32>
    %58 = vector.broadcast %57 : vector<1x128xf32> to vector<128x128xf32>
    %59 = arith.addf %54, %58 : vector<128x128xf32>
    %60 = arith.addf %49, %59 : vector<128x128xf32>
    %cst_54 = arith.constant 0.000000e+00 : f32
    %61 = vector.broadcast %cst_54 : f32 to vector<128x128xf32>
    %62 = arith.maximumf %60, %61 : vector<128x128xf32>
    %63 = tpu.transpose %62, [1, 0] : vector<128x128xf32> -> vector<128x128xf32>
    %c0_55 = arith.constant 0 : index
    %c0_56 = arith.constant 0 : index
    %c0_57 = arith.constant 0 : index
    %64 = vector.load %arg9[%c0_55, %c0_56, %c0_57] : memref<1x128x128xf32, #tpu.memory_space<vmem>>, vector<1x128x128xf32>
    %65 = vector.shape_cast %64 : vector<1x128x128xf32> to vector<128x128xf32>
    %66 = vector.shape_cast %63 : vector<128x128xf32> to vector<1x128x128xf32>
    tpu.vector_store %arg9[%c0_55, %c0_56, %c0_57], %66 {strides = array<i32>} : memref<1x128x128xf32, #tpu.memory_space<vmem>>, vector<1x128x128xf32>,
    return
  }
  func.func @transform_0(%arg0: i32, %arg1: i32) -> (i32, i32, i32, i32) {
    %c0_i32 = arith.constant 0 : i32
    %c0_i32_0 = arith.constant 0 : i32
    %c0_i32_1 = arith.constant 0 : i32
    return %arg0, %arg1, %c0_i32, %c0_i32_0 : i32, i32, i32, i32
  }
  func.func @transform_1(%arg0: i32, %arg1: i32) -> (i32, i32, i32) {
    %c0_i32 = arith.constant 0 : i32
    %c0_i32_0 = arith.constant 0 : i32
    %c0_i32_1 = arith.constant 0 : i32
    %c0_i32_2 = arith.constant 0 : i32
    return %c0_i32, %c0_i32_0, %c0_i32_1 : i32, i32, i32
  }
  func.func @transform_2(%arg0: i32, %arg1: i32) -> (i32, i32) {
    %c0_i32 = arith.constant 0 : i32
    %c0_i32_0 = arith.constant 0 : i32
    %c0_i32_1 = arith.constant 0 : i32
    return %c0_i32, %c0_i32_0 : i32, i32
  }
  func.func @transform_3(%arg0: i32, %arg1: i32) -> (i32, i32, i32) {
    %c0_i32 = arith.constant 0 : i32
    %c0_i32_0 = arith.constant 0 : i32
    %c0_i32_1 = arith.constant 0 : i32
    %c0_i32_2 = arith.constant 0 : i32
    return %c0_i32, %c0_i32_0, %c0_i32_1 : i32, i32, i32
  }
  func.func @transform_4(%arg0: i32, %arg1: i32) -> (i32, i32) {
    %c0_i32 = arith.constant 0 : i32
    %c0_i32_0 = arith.constant 0 : i32
    %c0_i32_1 = arith.constant 0 : i32
    return %c0_i32, %c0_i32_0 : i32, i32
  }
  func.func @transform_5(%arg0: i32, %arg1: i32) -> (i32, i32, i32) {
    %c0_i32 = arith.constant 0 : i32
    %c0_i32_0 = arith.constant 0 : i32
    %c0_i32_1 = arith.constant 0 : i32
    %c0_i32_2 = arith.constant 0 : i32
    return %c0_i32, %c0_i32_0, %c0_i32_1 : i32, i32, i32
  }
  func.func @transform_6(%arg0: i32, %arg1: i32) -> (i32, i32) {
    %c0_i32 = arith.constant 0 : i32
    %c0_i32_0 = arith.constant 0 : i32
    %c0_i32_1 = arith.constant 0 : i32
    return %c0_i32, %c0_i32_0 : i32, i32
  }
  func.func @transform_7(%arg0: i32, %arg1: i32) -> (i32, i32, i32) {
    %c0_i32 = arith.constant 0 : i32
    %c0_i32_0 = arith.constant 0 : i32
    return %arg0, %c0_i32, %arg1 : i32, i32, i32
  }
}

</mosaic_0001>

<llo_original>
// kernel: tpu_custom_call.1
$region0: #{tpu_custom_call.1}
  #allocation0 [shape = 'u32[]', space=smem, size = 0x4, offset = 0x4, fixed_abs, tag = 'smem constant byte address 0x4 - core index']
  #allocation1 [shape = 'u32[72,128]{1,0:T(1,128)}', space=vmem, size = 0x9000, scoped, tag = 'internal scratch']
  #allocation2 [shape = 'f32[132,128]{1,0:T(8,128)}', space=vmem, size = 0x11000, scoped, tag = 'scratch operand']
  %s0 = inlined_call_operand.hbm [shape: f32[2,1,136,128], index: 0, kind: input, shape index: {}]
  %s1 = inlined_call_operand.hbm [shape: f32[3,128,128], index: 1, kind: input, shape index: {}]
  %s2 = inlined_call_operand.vmem [shape: f32[1,128], index: 2, kind: input, shape index: {}]
  %s3 = inlined_call_operand.hbm [shape: f32[3,128,128], index: 3, kind: input, shape index: {}]
  %s4 = inlined_call_operand.vmem [shape: f32[1,128], index: 4, kind: input, shape index: {}]
  %s5 = inlined_call_operand.hbm [shape: f32[1,128,128], index: 5, kind: input, shape index: {}]
  %s6 = inlined_call_operand.vmem [shape: f32[1,128], index: 6, kind: input, shape index: {}]
  %s7 = inlined_call_operand.hbm [shape: f32[2,128,128], index: 7, kind: output, shape index: {}]
  %s8 = sld [smem:[#allocation0]]
  $region81: #{tpu_custom_call.1} parent=0
    _
  %s10 = ssub.s32 1, %s8
  %s11 = scalar_select 0, %s10, %s8
  $region1: #{tpu_custom_call.1} parent=0
    #allocation3 [shape = 'u8[139264]{0}', space=vmem, size = 0x22000, scoped, tag = 'input window, operand 0']
    #allocation4 [shape = 's32[2]{0}', space=sflag, size = 0x8, scoped, tag = 'scoped memory for tpu_custom_call.1']
    #allocation5 [shape = 's32[2]{0}', space=sflag, size = 0x8, scoped, tag = 'scoped memory for tpu_custom_call.1']
    #allocation6 [shape = 'u8[196608]{0}', space=vmem, size = 0x30000, scoped, tag = 'input window, operand 1, single buffered']
    #allocation7 [shape = 's32[1]{0}', space=sflag, size = 0x4, scoped, tag = 'scoped memory for tpu_custom_call.1']
    #allocation8 [shape = 'u8[196608]{0}', space=vmem, size = 0x30000, scoped, tag = 'input window, operand 3, single buffered']
    #allocation9 [shape = 'u8[65536]{0}', space=vmem, size = 0x10000, scoped, tag = 'input window, operand 5, single buffered']
    #allocation10 [shape = 's32[1]{0}', space=sflag, size = 0x4, scoped, tag = 'scoped memory for tpu_custom_call.1']
    #allocation11 [shape = 'u8[131072]{0}', space=vmem, size = 0x20000, scoped, tag = 'output window, operand 0']
    %12 = vsyncpa [#allocation4], 0
    %s13 = scalar_lea.sflag [#allocation4], 1
    %14 = vsyncpa %s13, 0
    %15 = vsyncpa [#allocation7], 0
    %16 = vsyncpa [#allocation10], 0
    %17 = vsyncpa [#allocation5], 0
    %s18 = scalar_lea.sflag [#allocation5], 1
    %19 = vsyncpa %s18, 0
    loop: start=0, step=1, limit=4
    $region2: #{tpu_custom_call.1} parent=1 // loop_pre_header
      _
    $region3: #{tpu_custom_call.1} parent=1 // loop_header
      %s21 = sphi 0, %s25
      %p22 = scmp.ge.s32.totalorder %s21, 4
      %s28 = sphi 0, %s40
      %s29 = sphi 0, %s36
      %s30 = sphi 0, %s28
      %s31 = sphi 0, %s29
      %s32 = sphi 0, %s30
      %s33 = sphi 0, %s31
      %s45 = sphi 0, %s47
      %s48 = sphi 0, %s45
      %s49 = sphi 0, %s48
      %s65 = sphi 0, %s49
      %s69 = sphi 0, %s69
      %s71 = sphi 0, %s69
      %s72 = sphi 0, %s71
      %s86 = sphi 0, %s72
      %s90 = sphi 0, %s90
      %s92 = sphi 0, %s90
      %s93 = sphi 0, %s92
      %s107 = sphi 0, %s93
      %s111 = sphi 0, %s111
      %s113 = sphi 0, %s111
      %s114 = sphi 0, %s113
      %s128 = sphi 0, %s114
      %s132 = sphi 0, %s132
      %s134 = sphi 0, %s132
      %s135 = sphi 0, %s134
      %s149 = sphi 0, %s135
      %s153 = sphi 0, %s153
      %s155 = sphi 0, %s153
      %s156 = sphi 0, %s155
      %s170 = sphi 0, %s156
      %s174 = sphi 0, %s174
      %s176 = sphi 0, %s174
      %s177 = sphi 0, %s176
      %s191 = sphi 0, %s177
      %s199 = sphi 0, %s201
      %s202 = sphi 0, %s199
      %s203 = sphi 0, %s202
      %s219 = sphi 0, %s203
    $region4: #{tpu_custom_call.1} parent=1 // loop_header_branch
      %24 = sbr.rel (%p22) target = $region8
    $region5: #{tpu_custom_call.1} parent=1 // loop_body
      %s26 = ssub.s32 %s21, 1
      %s27 = ssub.s32 %s21, 2
      %s34 = sadd.s32 1, %s29
      %p35 = scmp.ge.s32.totalorder %s34, 1
      %s36 = scalar_select %p35, 0, %s34
      %s37 = sadd.s32 1, %s28
      %s38 = scalar_select %p35, %s37, %s28
      %p39 = scmp.ge.s32.totalorder %s38, 2
      %s40 = scalar_select %p39, 0, %s38
      %s41 = ssub.s32 %s28, %s40
      %s42 = ssub.s32 %s29, %s36
      %s43 = sor.u32 %s41, %s42
      %p44 = scmp.eq.s32.totalorder %s43, 0
      %s46 = sadd.s32 %s45, 1
      %s47 = scalar_select %p44, %s45, %s46
      %p50 = pneg %p44
      %p51 = scmp.eq.s32.totalorder %s21, 1
      %p52 = por %p50, %p51
      %p53 = scmp.ne.s32.totalorder %s45, %s48
      %p54 = scmp.eq.s32.totalorder %s21, 0
      %p55 = por %p53, %p54
      %p56 = scmp.ne.s32.totalorder %s45, %s48
      %p57 = scmp.eq.s32.totalorder %s26, 1
      %p58 = por %p56, %p57
      %p59 = scmp.ne.s32.totalorder %s48, %s49
      %p60 = scmp.eq.s32.totalorder %s26, 0
      %p61 = por %p59, %p60
      %p62 = scmp.ne.s32.totalorder %s48, %s49
      %p63 = scmp.eq.s32.totalorder %s27, 1
      %p64 = por %p62, %p63
      %p66 = scmp.ne.s32.totalorder %s49, %s65
      %p67 = scmp.eq.s32.totalorder %s27, 0
      %p68 = por %p66, %p67
      %s70 = sadd.s32 %s69, 1
      %p73 = scmp.eq.s32.totalorder %s21, 1
      %p74 = scmp.ne.s32.totalorder %s69, %s71
      %p75 = scmp.eq.s32.totalorder %s21, 0
      %p76 = por %p74, %p75
      %p77 = scmp.ne.s32.totalorder %s69, %s71
      %p78 = scmp.eq.s32.totalorder %s26, 1
      %p79 = por %p77, %p78
      %p80 = scmp.ne.s32.totalorder %s71, %s72
      %p81 = scmp.eq.s32.totalorder %s26, 0
      %p82 = por %p80, %p81
      %p83 = scmp.ne.s32.totalorder %s71, %s72
      %p84 = scmp.eq.s32.totalorder %s27, 1
      %p85 = por %p83, %p84
      %p87 = scmp.ne.s32.totalorder %s72, %s86
      %p88 = scmp.eq.s32.totalorder %s27, 0
      %p89 = por %p87, %p88
      %s91 = sadd.s32 %s90, 1
      %p94 = scmp.eq.s32.totalorder %s21, 1
      %p95 = scmp.ne.s32.totalorder %s90, %s92
      %p96 = scmp.eq.s32.totalorder %s21, 0
      %p97 = por %p95, %p96
      %p98 = scmp.ne.s32.totalorder %s90, %s92
      %p99 = scmp.eq.s32.totalorder %s26, 1
      %p100 = por %p98, %p99
      %p101 = scmp.ne.s32.totalorder %s92, %s93
      %p102 = scmp.eq.s32.totalorder %s26, 0
      %p103 = por %p101, %p102
      %p104 = scmp.ne.s32.totalorder %s92, %s93
      %p105 = scmp.eq.s32.totalorder %s27, 1
      %p106 = por %p104, %p105
      %p108 = scmp.ne.s32.totalorder %s93, %s107
      %p109 = scmp.eq.s32.totalorder %s27, 0
      %p110 = por %p108, %p109
      %s112 = sadd.s32 %s111, 1
      %p115 = scmp.eq.s32.totalorder %s21, 1
      %p116 = scmp.ne.s32.totalorder %s111, %s113
      %p117 = scmp.eq.s32.totalorder %s21, 0
      %p118 = por %p116, %p117
      %p119 = scmp.ne.s32.totalorder %s111, %s113
      %p120 = scmp.eq.s32.totalorder %s26, 1
      %p121 = por %p119, %p120
      %p122 = scmp.ne.s32.totalorder %s113, %s114
      %p123 = scmp.eq.s32.totalorder %s26, 0
      %p124 = por %p122, %p123
      %p125 = scmp.ne.s32.totalorder %s113, %s114
      %p126 = scmp.eq.s32.totalorder %s27, 1
      %p127 = por %p125, %p126
      %p129 = scmp.ne.s32.totalorder %s114, %s128
      %p130 = scmp.eq.s32.totalorder %s27, 0
      %p131 = por %p129, %p130
      %s133 = sadd.s32 %s132, 1
      %p136 = scmp.eq.s32.totalorder %s21, 1
      %p137 = scmp.ne.s32.totalorder %s132, %s134
      %p138 = scmp.eq.s32.totalorder %s21, 0
      %p139 = por %p137, %p138
      %p140 = scmp.ne.s32.totalorder %s132, %s134
      %p141 = scmp.eq.s32.totalorder %s26, 1
      %p142 = por %p140, %p141
      %p143 = scmp.ne.s32.totalorder %s134, %s135
      %p144 = scmp.eq.s32.totalorder %s26, 0
      %p145 = por %p143, %p144
      %p146 = scmp.ne.s32.totalorder %s134, %s135
      %p147 = scmp.eq.s32.totalorder %s27, 1
      %p148 = por %p146, %p147
      %p150 = scmp.ne.s32.totalorder %s135, %s149
      %p151 = scmp.eq.s32.totalorder %s27, 0
      %p152 = por %p150, %p151
      %s154 = sadd.s32 %s153, 1
      %p157 = scmp.eq.s32.totalorder %s21, 1
      %p158 = scmp.ne.s32.totalorder %s153, %s155
      %p159 = scmp.eq.s32.totalorder %s21, 0
      %p160 = por %p158, %p159
      %p161 = scmp.ne.s32.totalorder %s153, %s155
      %p162 = scmp.eq.s32.totalorder %s26, 1
      %p163 = por %p161, %p162
      %p164 = scmp.ne.s32.totalorder %s155, %s156
      %p165 = scmp.eq.s32.totalorder %s26, 0
      %p166 = por %p164, %p165
      %p167 = scmp.ne.s32.totalorder %s155, %s156
      %p168 = scmp.eq.s32.totalorder %s27, 1
      %p169 = por %p167, %p168
      %p171 = scmp.ne.s32.totalorder %s156, %s170
      %p172 = scmp.eq.s32.totalorder %s27, 0
      %p173 = por %p171, %p172
      %s175 = sadd.s32 %s174, 1
      %p178 = scmp.eq.s32.totalorder %s21, 1
      %p179 = scmp.ne.s32.totalorder %s174, %s176
      %p180 = scmp.eq.s32.totalorder %s21, 0
      %p181 = por %p179, %p180
      %p182 = scmp.ne.s32.totalorder %s174, %s176
      %p183 = scmp.eq.s32.totalorder %s26, 1
      %p184 = por %p182, %p183
      %p185 = scmp.ne.s32.totalorder %s176, %s177
      %p186 = scmp.eq.s32.totalorder %s26, 0
      %p187 = por %p185, %p186
      %p188 = scmp.ne.s32.totalorder %s176, %s177
      %p189 = scmp.eq.s32.totalorder %s27, 1
      %p190 = por %p188, %p189
      %p192 = scmp.ne.s32.totalorder %s177, %s191
      %p193 = scmp.eq.s32.totalorder %s27, 0
      %p194 = por %p192, %p193
      %s195 = ssub.s32 %s28, %s40
      %s196 = ssub.s32 %s29, %s36
      %s197 = sor.u32 %s195, %s196
      %p198 = scmp.eq.s32.totalorder %s197, 0
      %s200 = sadd.s32 %s199, 1
      %s201 = scalar_select %p198, %s199, %s200
      %p204 = pneg %p198
      %p205 = scmp.eq.s32.totalorder %s21, 1
      %p206 = por %p204, %p205
      %p207 = scmp.ne.s32.totalorder %s199, %s202
      %p208 = scmp.eq.s32.totalorder %s21, 0
      %p209 = por %p207, %p208
      %p210 = scmp.ne.s32.totalorder %s199, %s202
      %p211 = scmp.eq.s32.totalorder %s26, 1
      %p212 = por %p210, %p211
      %p213 = scmp.ne.s32.totalorder %s202, %s203
      %p214 = scmp.eq.s32.totalorder %s26, 0
      %p215 = por %p213, %p214
      %p216 = scmp.ne.s32.totalorder %s202, %s203
      %p217 = scmp.eq.s32.totalorder %s27, 1
      %p218 = por %p216, %p217
      %p220 = scmp.ne.s32.totalorder %s203, %s219
      %p221 = scmp.eq.s32.totalorder %s27, 0
      %p222 = por %p220, %p221
      %p223 = scmp.le.s32.totalorder 1, %s21
      %p224 = scmp.lt.s32.totalorder %s21, 3
      %p225 = pnand %p223, %p224
      %p226 = pneg %p225
      // Predicated region
      $region9: #{tpu_custom_call.1} parent=5 // pred_check
        _
      $region10: #{tpu_custom_call.1} parent=5 // pred_check_branch
        %228 = sbr.rel (%p225) target = $region12
      $region11: #{tpu_custom_call.1} parent=5 // pred_region
        %s229 = ssub.s32 %s21, 1
        // Predicated region
        $region13: #{tpu_custom_call.1} parent=11 // pred_check
          %p230 = pneg %p82
        $region14: #{tpu_custom_call.1} parent=11 // pred_check_branch
          %232 = sbr.rel (%p230) target = $region16
        $region15: #{tpu_custom_call.1} parent=11 // pred_region
          %234 = vsyncadd [#allocation7], 0
          %s235 = sshll.u32 %s1, 4
          %s236 = int_to_ptr.hbm [resolvable:$true] %s235
          %s237 = sshll.u32 [#allocation6], 4
          %s238 = int_to_ptr.vmem [resolvable:$true] %s237
          %243 = dma.hbm_to_vmem [thread:$0]  %s236, 6144, %s238, [#allocation7], 128, 128, 8
        $region16: #{tpu_custom_call.1} parent=11 // pred_fallthru
          _
        // Predicated region
        $region17: #{tpu_custom_call.1} parent=11 // pred_check
          %p244 = pneg %p103
        $region18: #{tpu_custom_call.1} parent=11 // pred_check_branch
          %246 = sbr.rel (%p244) target = $region20
        $region19: #{tpu_custom_call.1} parent=11 // pred_region
          _
        $region20: #{tpu_custom_call.1} parent=11 // pred_fallthru
          _
        // Predicated region
        $region21: #{tpu_custom_call.1} parent=11 // pred_check
          %p247 = pneg %p124
        $region22: #{tpu_custom_call.1} parent=11 // pred_check_branch
          %249 = sbr.rel (%p247) target = $region24
        $region23: #{tpu_custom_call.1} parent=11 // pred_region
          %251 = vsyncadd [#allocation7], 0
          %s252 = sshll.u32 %s3, 4
          %s253 = int_to_ptr.hbm [resolvable:$true] %s252
          %s254 = sshll.u32 [#allocation8], 4
          %s255 = int_to_ptr.vmem [resolvable:$true] %s254
          %260 = dma.hbm_to_vmem [thread:$0]  %s253, 6144, %s255, [#allocation7], 128, 128, 8
        $region24: #{tpu_custom_call.1} parent=11 // pred_fallthru
          _
        // Predicated region
        $region25: #{tpu_custom_call.1} parent=11 // pred_check
          %p261 = pneg %p145
        $region26: #{tpu_custom_call.1} parent=11 // pred_check_branch
          %263 = sbr.rel (%p261) target = $region28
        $region27: #{tpu_custom_call.1} parent=11 // pred_region
          _
        $region28: #{tpu_custom_call.1} parent=11 // pred_fallthru
          _
        // Predicated region
        $region29: #{tpu_custom_call.1} parent=11 // pred_check
          %p264 = pneg %p166
        $region30: #{tpu_custom_call.1} parent=11 // pred_check_branch
          %266 = sbr.rel (%p264) target = $region32
        $region31: #{tpu_custom_call.1} parent=11 // pred_region
          %268 = vsyncadd [#allocation10], 0
          %s269 = sshll.u32 %s5, 4
          %s270 = int_to_ptr.hbm [resolvable:$true] %s269
          %s271 = sshll.u32 [#allocation9], 4
          %s272 = int_to_ptr.vmem [resolvable:$true] %s271
          %277 = dma.hbm_to_vmem [thread:$0]  %s270, 2048, %s272, [#allocation10], 128, 128, 8
        $region32: #{tpu_custom_call.1} parent=11 // pred_fallthru
          _
        // Predicated region
        $region33: #{tpu_custom_call.1} parent=11 // pred_check
          %p278 = pneg %p187
        $region34: #{tpu_custom_call.1} parent=11 // pred_check_branch
          %280 = sbr.rel (%p278) target = $region36
        $region35: #{tpu_custom_call.1} parent=11 // pred_region
          _
        $region36: #{tpu_custom_call.1} parent=11 // pred_fallthru
          _
      $region12: #{tpu_custom_call.1} parent=5 // pred_fallthru
        _
      %p281 = scmp.lt.s32.totalorder %s21, 2
      // Predicated region
      $region37: #{tpu_custom_call.1} parent=5 // pred_check
        %p282 = pneg %p281
      $region38: #{tpu_custom_call.1} parent=5 // pred_check_branch
        %284 = sbr.rel (%p282) target = $region40
      $region39: #{tpu_custom_call.1} parent=5 // pred_region
        // Predicated region
        $region41: #{tpu_custom_call.1} parent=39 // pred_check
          %p285 = pneg %p55
        $region42: #{tpu_custom_call.1} parent=39 // pred_check_branch
          %287 = sbr.rel (%p285) target = $region44
        $region43: #{tpu_custom_call.1} parent=39 // pred_region
          %s288 = sand.u32 %s45, 1
          %s289 = scalar_lea.sflag [#allocation4], %s288
          %s290 = sand.u32 %s45, 1
          %s291 = smul.addr %s290, 136
          %s292 = scalar_lea.vmem [#allocation3], %s291
          %294 = vsyncadd %s289, 0
          %s295 = smul.addr %s29, 17
          %s296 = smul.addr %s28, 17
          %s297 = sadd.s32 %s295, %s296
          %s298 = smul.addr %s297, 8
          %s299 = scalar_lea.hbm %s0, %s298
          %s300 = sshll.u32 %s299, 4
          %s301 = int_to_ptr.hbm [resolvable:$true] %s300
          %s302 = sshll.u32 %s292, 4
          %s303 = int_to_ptr.vmem [resolvable:$true] %s302
          %308 = dma.hbm_to_vmem [thread:$0]  %s301, 2176, %s303, %s289, 128, 128, 8
        $region44: #{tpu_custom_call.1} parent=39 // pred_fallthru
          _
      $region40: #{tpu_custom_call.1} parent=5 // pred_fallthru
        _
      %p309 = scmp.le.s32.totalorder 1, %s21
      %p310 = scmp.lt.s32.totalorder %s21, 3
      %p311 = pnand %p309, %p310
      %p312 = pneg %p311
      // Predicated region
      $region45: #{tpu_custom_call.1} parent=5 // pred_check
        _
      $region46: #{tpu_custom_call.1} parent=5 // pred_check_branch
        %314 = sbr.rel (%p311) target = $region48
      $region47: #{tpu_custom_call.1} parent=5 // pred_region
        %s315 = ssub.s32 %s21, 1
        %s316 = sand.u32 %s48, 1
        %s317 = scalar_lea.sflag [#allocation4], %s316
        %s318 = sand.u32 %s48, 1
        %s319 = smul.addr %s318, 136
        %s320 = scalar_lea.vmem [#allocation3], %s319
        // Predicated region
        $region49: #{tpu_custom_call.1} parent=47 // pred_check
          %p321 = pneg %p61
        $region50: #{tpu_custom_call.1} parent=47 // pred_check_branch
          %323 = sbr.rel (%p321) target = $region52
        $region51: #{tpu_custom_call.1} parent=47 // pred_region
          %325 = dma.done %s317, 2176
        $region52: #{tpu_custom_call.1} parent=47 // pred_fallthru
          _
        // Predicated region
        $region53: #{tpu_custom_call.1} parent=47 // pred_check
          %p326 = pneg %p82
        $region54: #{tpu_custom_call.1} parent=47 // pred_check_branch
          %328 = sbr.rel (%p326) target = $region56
        $region55: #{tpu_custom_call.1} parent=47 // pred_region
          %330 = dma.done [#allocation7], 6144
        $region56: #{tpu_custom_call.1} parent=47 // pred_fallthru
          _
        // Predicated region
        $region57: #{tpu_custom_call.1} parent=47 // pred_check
          %p331 = pneg %p124
        $region58: #{tpu_custom_call.1} parent=47 // pred_check_branch
          %333 = sbr.rel (%p331) target = $region60
        $region59: #{tpu_custom_call.1} parent=47 // pred_region
          %335 = dma.done [#allocation7], 6144
        $region60: #{tpu_custom_call.1} parent=47 // pred_fallthru
          _
        // Predicated region
        $region61: #{tpu_custom_call.1} parent=47 // pred_check
          %p336 = pneg %p166
        $region62: #{tpu_custom_call.1} parent=47 // pred_check_branch
          %338 = sbr.rel (%p336) target = $region64
        $region63: #{tpu_custom_call.1} parent=47 // pred_region
          %340 = dma.done [#allocation10], 2048
        $region64: #{tpu_custom_call.1} parent=47 // pred_fallthru
          _
        %s341 = sand.u32 %s48, 1
        %s342 = scalar_lea.sflag [#allocation4], %s341
        %s343 = sand.u32 %s48, 1
        %s344 = smul.addr %s343, 136
        %s345 = scalar_lea.vmem [#allocation3], %s344
        %p346 = pneg %p61
        %p347 = pneg %p58
        %p348 = pneg %p82
        %p349 = pneg %p79
        %p350 = pneg %p103
        %p351 = pneg %p100
        %p352 = pneg %p124
        %p353 = pneg %p121
        %p354 = pneg %p145
        %p355 = pneg %p142
        %p356 = pneg %p166
        %p357 = pneg %p163
        %p358 = pneg %p187
        %p359 = pneg %p184
        %p360 = pneg %p215
        %p361 = pneg %p212
        %s362 = sand.u32 %s202, 1
        %s363 = scalar_lea.sflag [#allocation5], %s362
        %s364 = sand.u32 %s202, 1
        %s365 = smul.addr %s364, 128
        %s366 = scalar_lea.vmem [#allocation11], %s365
        %v367 = vld [vmem:[%s320] sm:$0xff]
        %v368 = vld [vmem:[%s320 + $0x8] sm:$0xff]
        %v369 = vld [vmem:[%s320 + $0x10] sm:$0xff]
        %v370 = vld [vmem:[%s320 + $0x18] sm:$0xff]
        %v371 = vld [vmem:[%s320 + $0x20] sm:$0xff]
        %v372 = vld [vmem:[%s320 + $0x28] sm:$0xff]
        %v373 = vld [vmem:[%s320 + $0x30] sm:$0xff]
        %v374 = vld [vmem:[%s320 + $0x38] sm:$0xff]
        %v375 = vld [vmem:[%s320 + $0x40] sm:$0xff]
        %v376 = vld [vmem:[%s320 + $0x48] sm:$0xff]
        %v377 = vld [vmem:[%s320 + $0x50] sm:$0xff]
        %v378 = vld [vmem:[%s320 + $0x58] sm:$0xff]
        %v379 = vld [vmem:[%s320 + $0x60] sm:$0xff]
        %v380 = vld [vmem:[%s320 + $0x68] sm:$0xff]
        %v381 = vld [vmem:[%s320 + $0x70] sm:$0xff]
        %v382 = vld [vmem:[%s320 + $0x78] sm:$0xff]
        %v383 = vld [vmem:[%s320 + $0x80] sm:$0xf]
        %v384 = vld [vmem:[#allocation6] sm:$0xff]
        %v385 = vld [vmem:[#allocation6 + $0x8] sm:$0xff]
        %v386 = vld [vmem:[#allocation6 + $0x10] sm:$0xff]
        %v387 = vld [vmem:[#allocation6 + $0x18] sm:$0xff]
        %v388 = vld [vmem:[#allocation6 + $0x20] sm:$0xff]
        %v389 = vld [vmem:[#allocation6 + $0x28] sm:$0xff]
        %v390 = vld [vmem:[#allocation6 + $0x30] sm:$0xff]
        %v391 = vld [vmem:[#allocation6 + $0x38] sm:$0xff]
        %v392 = vld [vmem:[#allocation6 + $0x40] sm:$0xff]
        %v393 = vld [vmem:[#allocation6 + $0x48] sm:$0xff]
        %v394 = vld [vmem:[#allocation6 + $0x50] sm:$0xff]
        %v395 = vld [vmem:[#allocation6 + $0x58] sm:$0xff]
        %v396 = vld [vmem:[#allocation6 + $0x60] sm:$0xff]
        %v397 = vld [vmem:[#allocation6 + $0x68] sm:$0xff]
        %v398 = vld [vmem:[#allocation6 + $0x70] sm:$0xff]
        %v399 = vld [vmem:[#allocation6 + $0x78] sm:$0xff]
        %v400 = vld [vmem:[%s320 + $0x2] sm:$0xff]
        %v401 = vld [vmem:[%s320 + $0xa] sm:$0xff]
        %v402 = vld [vmem:[%s320 + $0x12] sm:$0xff]
        %v403 = vld [vmem:[%s320 + $0x1a] sm:$0xff]
        %v404 = vld [vmem:[%s320 + $0x22] sm:$0xff]
        %v405 = vld [vmem:[%s320 + $0x2a] sm:$0xff]
        %v406 = vld [vmem:[%s320 + $0x32] sm:$0xff]
        %v407 = vld [vmem:[%s320 + $0x3a] sm:$0xff]
        %v408 = vld [vmem:[%s320 + $0x42] sm:$0xff]
        %v409 = vld [vmem:[%s320 + $0x4a] sm:$0xff]
        %v410 = vld [vmem:[%s320 + $0x52] sm:$0xff]
        %v411 = vld [vmem:[%s320 + $0x5a] sm:$0xff]
        %v412 = vld [vmem:[%s320 + $0x62] sm:$0xff]
        %v413 = vld [vmem:[%s320 + $0x6a] sm:$0xff]
        %v414 = vld [vmem:[%s320 + $0x72] sm:$0xff]
        %v415 = vld [vmem:[%s320 + $0x7a] sm:$0xff]
        %v416 = vld [vmem:[%s320 + $0x82] sm:$0xf]
        %s417 = scalar_lea.vmem [#allocation6], 128
        %v418 = vld [vmem:[%s417] sm:$0xff]
        %v419 = vld [vmem:[%s417 + $0x8] sm:$0xff]
        %v420 = vld [vmem:[%s417 + $0x10] sm:$0xff]
        %v421 = vld [vmem:[%s417 + $0x18] sm:$0xff]
        %v422 = vld [vmem:[%s417 + $0x20] sm:$0xff]
        %v423 = vld [vmem:[%s417 + $0x28] sm:$0xff]
        %v424 = vld [vmem:[%s417 + $0x30] sm:$0xff]
        %v425 = vld [vmem:[%s417 + $0x38] sm:$0xff]
        %v426 = vld [vmem:[%s417 + $0x40] sm:$0xff]
        %v427 = vld [vmem:[%s417 + $0x48] sm:$0xff]
        %v428 = vld [vmem:[%s417 + $0x50] sm:$0xff]
        %v429 = vld [vmem:[%s417 + $0x58] sm:$0xff]
        %v430 = vld [vmem:[%s417 + $0x60] sm:$0xff]
        %v431 = vld [vmem:[%s417 + $0x68] sm:$0xff]
        %v432 = vld [vmem:[%s417 + $0x70] sm:$0xff]
        %v433 = vld [vmem:[%s417 + $0x78] sm:$0xff]
        %434 = vmatpush.msra.mxu0 %v433
        %435 = vmatpush.msra.mxu0 %v432
        %436 = vmatpush.msra.mxu0 %v431
        %437 = vmatpush.msra.mxu0 %v430
        %438 = vmatpush.msra.mxu0 %v429
        %439 = vmatpush.msra.mxu0 %v428
        %440 = vmatpush.msra.mxu0 %v427
        %441 = vmatpush.msra.mxu0 %v426
        %442 = vmatpush.msra.mxu0 %v425
        %443 = vmatpush.msra.mxu0 %v424
        %444 = vmatpush.msra.mxu0 %v423
        %445 = vmatpush.msra.mxu0 %v422
        %446 = vmatpush.msra.mxu0 %v421
        %447 = vmatpush.msra.mxu0 %v420
        %448 = vmatpush.msra.mxu0 %v419
        %449 = vmatpush.msra.mxu0 %v418
        %450 = vmatmul.f32.gmra.mxu0 %v400
        %v451 = vpop.f32.mrf.mxu0
        %v452 = vadd.f32 0.0, %v451
        %453 = vmatmul.f32.gmra.mxu0 %v401
        %v454 = vpop.f32.mrf.mxu0
        %v455 = vadd.f32 0.0, %v454
        %456 = vmatmul.f32.gmra.mxu0 %v402
        %v457 = vpop.f32.mrf.mxu0
        %v458 = vadd.f32 0.0, %v457
        %459 = vmatmul.f32.gmra.mxu0 %v403
        %v460 = vpop.f32.mrf.mxu0
        %v461 = vadd.f32 0.0, %v460
        %462 = vmatmul.f32.gmra.mxu0 %v404
        %v463 = vpop.f32.mrf.mxu0
        %v464 = vadd.f32 0.0, %v463
        %465 = vmatmul.f32.gmra.mxu0 %v405
        %v466 = vpop.f32.mrf.mxu0
        %v467 = vadd.f32 0.0, %v466
        %468 = vmatmul.f32.gmra.mxu0 %v406
        %v469 = vpop.f32.mrf.mxu0
        %v470 = vadd.f32 0.0, %v469
        %471 = vmatmul.f32.gmra.mxu0 %v407
        %v472 = vpop.f32.mrf.mxu0
        %v473 = vadd.f32 0.0, %v472
        %474 = vmatmul.f32.gmra.mxu0 %v408
        %v475 = vpop.f32.mrf.mxu0
        %v476 = vadd.f32 0.0, %v475
        %477 = vmatmul.f32.gmra.mxu0 %v409
        %v478 = vpop.f32.mrf.mxu0
        %v479 = vadd.f32 0.0, %v478
        %480 = vmatmul.f32.gmra.mxu0 %v410
        %v481 = vpop.f32.mrf.mxu0
        %v482 = vadd.f32 0.0, %v481
        %483 = vmatmul.f32.gmra.mxu0 %v411
        %v484 = vpop.f32.mrf.mxu0
        %v485 = vadd.f32 0.0, %v484
        %486 = vmatmul.f32.gmra.mxu0 %v412
        %v487 = vpop.f32.mrf.mxu0
        %v488 = vadd.f32 0.0, %v487
        %489 = vmatmul.f32.gmra.mxu0 %v413
        %v490 = vpop.f32.mrf.mxu0
        %v491 = vadd.f32 0.0, %v490
        %492 = vmatmul.f32.gmra.mxu0 %v414
        %v493 = vpop.f32.mrf.mxu0
        %v494 = vadd.f32 0.0, %v493
        %495 = vmatmul.f32.gmra.mxu0 %v415
        %v496 = vpop.f32.mrf.mxu0
        %v497 = vadd.f32 0.0, %v496
        %498 = vmatmul.f32.gmra.mxu0 %v416
        %v499 = vpop.f32.mrf.mxu0
        %v500 = vadd.f32 0.0, %v499
        %501 = vdwg.mxu0
        %502 = vmatpush.msra.mxu0 %v399
        %503 = vmatpush.msra.mxu0 %v398
        %504 = vmatpush.msra.mxu0 %v397
        %505 = vmatpush.msra.mxu0 %v396
        %506 = vmatpush.msra.mxu0 %v395
        %507 = vmatpush.msra.mxu0 %v394
        %508 = vmatpush.msra.mxu0 %v393
        %509 = vmatpush.msra.mxu0 %v392
        %510 = vmatpush.msra.mxu0 %v391
        %511 = vmatpush.msra.mxu0 %v390
        %512 = vmatpush.msra.mxu0 %v389
        %513 = vmatpush.msra.mxu0 %v388
        %514 = vmatpush.msra.mxu0 %v387
        %515 = vmatpush.msra.mxu0 %v386
        %516 = vmatpush.msra.mxu0 %v385
        %517 = vmatpush.msra.mxu0 %v384
        %518 = vmatmul.f32.gmra.mxu0 %v367
        %v519 = vpop.f32.mrf.mxu0
        %v520 = vadd.f32 %v452, %v519
        %521 = vmatmul.f32.gmra.mxu0 %v368
        %v522 = vpop.f32.mrf.mxu0
        %v523 = vadd.f32 %v455, %v522
        %524 = vmatmul.f32.gmra.mxu0 %v369
        %v525 = vpop.f32.mrf.mxu0
        %v526 = vadd.f32 %v458, %v525
        %527 = vmatmul.f32.gmra.mxu0 %v370
        %v528 = vpop.f32.mrf.mxu0
        %v529 = vadd.f32 %v461, %v528
        %530 = vmatmul.f32.gmra.mxu0 %v371
        %v531 = vpop.f32.mrf.mxu0
        %v532 = vadd.f32 %v464, %v531
        %533 = vmatmul.f32.gmra.mxu0 %v372
        %v534 = vpop.f32.mrf.mxu0
        %v535 = vadd.f32 %v467, %v534
        %536 = vmatmul.f32.gmra.mxu0 %v373
        %v537 = vpop.f32.mrf.mxu0
        %v538 = vadd.f32 %v470, %v537
        %539 = vmatmul.f32.gmra.mxu0 %v374
        %v540 = vpop.f32.mrf.mxu0
        %v541 = vadd.f32 %v473, %v540
        %542 = vmatmul.f32.gmra.mxu0 %v375
        %v543 = vpop.f32.mrf.mxu0
        %v544 = vadd.f32 %v476, %v543
        %545 = vmatmul.f32.gmra.mxu0 %v376
        %v546 = vpop.f32.mrf.mxu0
        %v547 = vadd.f32 %v479, %v546
        %548 = vmatmul.f32.gmra.mxu0 %v377
        %v549 = vpop.f32.mrf.mxu0
        %v550 = vadd.f32 %v482, %v549
        %551 = vmatmul.f32.gmra.mxu0 %v378
        %v552 = vpop.f32.mrf.mxu0
        %v553 = vadd.f32 %v485, %v552
        %554 = vmatmul.f32.gmra.mxu0 %v379
        %v555 = vpop.f32.mrf.mxu0
        %v556 = vadd.f32 %v488, %v555
        %557 = vmatmul.f32.gmra.mxu0 %v380
        %v558 = vpop.f32.mrf.mxu0
        %v559 = vadd.f32 %v491, %v558
        %560 = vmatmul.f32.gmra.mxu0 %v381
        %v561 = vpop.f32.mrf.mxu0
        %v562 = vadd.f32 %v494, %v561
        %563 = vmatmul.f32.gmra.mxu0 %v382
        %v564 = vpop.f32.mrf.mxu0
        %v565 = vadd.f32 %v497, %v564
        %566 = vmatmul.f32.gmra.mxu0 %v383
        %v567 = vpop.f32.mrf.mxu0
        %v568 = vadd.f32 %v500, %v567
        %569 = vdwg.mxu0
        %v570 = vld [vmem:[%s320 + $0x4] sm:$0xff]
        %v571 = vld [vmem:[%s320 + $0xc] sm:$0xff]
        %v572 = vld [vmem:[%s320 + $0x14] sm:$0xff]
        %v573 = vld [vmem:[%s320 + $0x1c] sm:$0xff]
        %v574 = vld [vmem:[%s320 + $0x24] sm:$0xff]
        %v575 = vld [vmem:[%s320 + $0x2c] sm:$0xff]
        %v576 = vld [vmem:[%s320 + $0x34] sm:$0xff]
        %v577 = vld [vmem:[%s320 + $0x3c] sm:$0xff]
        %v578 = vld [vmem:[%s320 + $0x44] sm:$0xff]
        %v579 = vld [vmem:[%s320 + $0x4c] sm:$0xff]
        %v580 = vld [vmem:[%s320 + $0x54] sm:$0xff]
        %v581 = vld [vmem:[%s320 + $0x5c] sm:$0xff]
        %v582 = vld [vmem:[%s320 + $0x64] sm:$0xff]
        %v583 = vld [vmem:[%s320 + $0x6c] sm:$0xff]
        %v584 = vld [vmem:[%s320 + $0x74] sm:$0xff]
        %v585 = vld [vmem:[%s320 + $0x7c] sm:$0xff]
        %v586 = vld [vmem:[%s320 + $0x84] sm:$0xf]
        %s587 = scalar_lea.vmem [#allocation6], 256
        %v588 = vld [vmem:[%s587] sm:$0xff]
        %v589 = vld [vmem:[%s587 + $0x8] sm:$0xff]
        %v590 = vld [vmem:[%s587 + $0x10] sm:$0xff]
        %v591 = vld [vmem:[%s587 + $0x18] sm:$0xff]
        %v592 = vld [vmem:[%s587 + $0x20] sm:$0xff]
        %v593 = vld [vmem:[%s587 + $0x28] sm:$0xff]
        %v594 = vld [vmem:[%s587 + $0x30] sm:$0xff]
        %v595 = vld [vmem:[%s587 + $0x38] sm:$0xff]
        %v596 = vld [vmem:[%s587 + $0x40] sm:$0xff]
        %v597 = vld [vmem:[%s587 + $0x48] sm:$0xff]
        %v598 = vld [vmem:[%s587 + $0x50] sm:$0xff]
        %v599 = vld [vmem:[%s587 + $0x58] sm:$0xff]
        %v600 = vld [vmem:[%s587 + $0x60] sm:$0xff]
        %v601 = vld [vmem:[%s587 + $0x68] sm:$0xff]
        %v602 = vld [vmem:[%s587 + $0x70] sm:$0xff]
        %v603 = vld [vmem:[%s587 + $0x78] sm:$0xff]
        %604 = vmatpush.msra.mxu0 %v603
        %605 = vmatpush.msra.mxu0 %v602
        %606 = vmatpush.msra.mxu0 %v601
        %607 = vmatpush.msra.mxu0 %v600
        %608 = vmatpush.msra.mxu0 %v599
        %609 = vmatpush.msra.mxu0 %v598
        %610 = vmatpush.msra.mxu0 %v597
        %611 = vmatpush.msra.mxu0 %v596
        %612 = vmatpush.msra.mxu0 %v595
        %613 = vmatpush.msra.mxu0 %v594
        %614 = vmatpush.msra.mxu0 %v593
        %615 = vmatpush.msra.mxu0 %v592
        %616 = vmatpush.msra.mxu0 %v591
        %617 = vmatpush.msra.mxu0 %v590
        %618 = vmatpush.msra.mxu0 %v589
        %619 = vmatpush.msra.mxu0 %v588
        %620 = vmatmul.f32.gmra.mxu0 %v570
        %v621 = vpop.f32.mrf.mxu0
        %v622 = vadd.f32 0.0, %v621
        %623 = vmatmul.f32.gmra.mxu0 %v571
        %v624 = vpop.f32.mrf.mxu0
        %v625 = vadd.f32 0.0, %v624
        %626 = vmatmul.f32.gmra.mxu0 %v572
        %v627 = vpop.f32.mrf.mxu0
        %v628 = vadd.f32 0.0, %v627
        %629 = vmatmul.f32.gmra.mxu0 %v573
        %v630 = vpop.f32.mrf.mxu0
        %v631 = vadd.f32 0.0, %v630
        %632 = vmatmul.f32.gmra.mxu0 %v574
        %v633 = vpop.f32.mrf.mxu0
        %v634 = vadd.f32 0.0, %v633
        %635 = vmatmul.f32.gmra.mxu0 %v575
        %v636 = vpop.f32.mrf.mxu0
        %v637 = vadd.f32 0.0, %v636
        %638 = vmatmul.f32.gmra.mxu0 %v576
        %v639 = vpop.f32.mrf.mxu0
        %v640 = vadd.f32 0.0, %v639
        %641 = vmatmul.f32.gmra.mxu0 %v577
        %v642 = vpop.f32.mrf.mxu0
        %v643 = vadd.f32 0.0, %v642
        %644 = vmatmul.f32.gmra.mxu0 %v578
        %v645 = vpop.f32.mrf.mxu0
        %v646 = vadd.f32 0.0, %v645
        %647 = vmatmul.f32.gmra.mxu0 %v579
        %v648 = vpop.f32.mrf.mxu0
        %v649 = vadd.f32 0.0, %v648
        %650 = vmatmul.f32.gmra.mxu0 %v580
        %v651 = vpop.f32.mrf.mxu0
        %v652 = vadd.f32 0.0, %v651
        %653 = vmatmul.f32.gmra.mxu0 %v581
        %v654 = vpop.f32.mrf.mxu0
        %v655 = vadd.f32 0.0, %v654
        %656 = vmatmul.f32.gmra.mxu0 %v582
        %v657 = vpop.f32.mrf.mxu0
        %v658 = vadd.f32 0.0, %v657
        %659 = vmatmul.f32.gmra.mxu0 %v583
        %v660 = vpop.f32.mrf.mxu0
        %v661 = vadd.f32 0.0, %v660
        %662 = vmatmul.f32.gmra.mxu0 %v584
        %v663 = vpop.f32.mrf.mxu0
        %v664 = vadd.f32 0.0, %v663
        %665 = vmatmul.f32.gmra.mxu0 %v585
        %v666 = vpop.f32.mrf.mxu0
        %v667 = vadd.f32 0.0, %v666
        %668 = vmatmul.f32.gmra.mxu0 %v586
        %v669 = vpop.f32.mrf.mxu0
        %v670 = vadd.f32 0.0, %v669
        %671 = vdwg.mxu0
        %v672 = vadd.f32 %v520, %v622
        %v673 = vadd.f32 %v523, %v625
        %v674 = vadd.f32 %v526, %v628
        %v675 = vadd.f32 %v529, %v631
        %v676 = vadd.f32 %v532, %v634
        %v677 = vadd.f32 %v535, %v637
        %v678 = vadd.f32 %v538, %v640
        %v679 = vadd.f32 %v541, %v643
        %v680 = vadd.f32 %v544, %v646
        %v681 = vadd.f32 %v547, %v649
        %v682 = vadd.f32 %v550, %v652
        %v683 = vadd.f32 %v553, %v655
        %v684 = vadd.f32 %v556, %v658
        %v685 = vadd.f32 %v559, %v661
        %v686 = vadd.f32 %v562, %v664
        %v687 = vadd.f32 %v565, %v667
        %v688 = vadd.f32 %v568, %v670
        %v689 = vld [vmem:[%s2] sm:$0x1]
        %v691 = vperm.slane %v689, 0
        %v693 = vadd.f32 %v672, %v691
        %v694 = vadd.f32 %v673, %v691
        %v695 = vadd.f32 %v674, %v691
        %v696 = vadd.f32 %v675, %v691
        %v697 = vadd.f32 %v676, %v691
        %v698 = vadd.f32 %v677, %v691
        %v699 = vadd.f32 %v678, %v691
        %v700 = vadd.f32 %v679, %v691
        %v701 = vadd.f32 %v680, %v691
        %v702 = vadd.f32 %v681, %v691
        %v703 = vadd.f32 %v682, %v691
        %v704 = vadd.f32 %v683, %v691
        %v705 = vadd.f32 %v684, %v691
        %v706 = vadd.f32 %v685, %v691
        %v707 = vadd.f32 %v686, %v691
        %v708 = vadd.f32 %v687, %v691
        %v709 = vadd.f32 %v688, %v691
        %v710 = vmax.f32 %v693, 0.0
        %v711 = vmax.f32 %v694, 0.0
        %v712 = vmax.f32 %v695, 0.0
        %v713 = vmax.f32 %v696, 0.0
        %v714 = vmax.f32 %v697, 0.0
        %v715 = vmax.f32 %v698, 0.0
        %v716 = vmax.f32 %v699, 0.0
        %v717 = vmax.f32 %v700, 0.0
        %v718 = vmax.f32 %v701, 0.0
        %v719 = vmax.f32 %v702, 0.0
        %v720 = vmax.f32 %v703, 0.0
        %v721 = vmax.f32 %v704, 0.0
        %v722 = vmax.f32 %v705, 0.0
        %v723 = vmax.f32 %v706, 0.0
        %v724 = vmax.f32 %v707, 0.0
        %v725 = vmax.f32 %v708, 0.0
        %v726 = vmax.f32 %v709, 0.0
        %727 = vst [vmem:[#allocation2] sm:$0xff] %v710
        %728 = vst [vmem:[#allocation2 + $0x8] sm:$0xff] %v711
        %729 = vst [vmem:[#allocation2 + $0x10] sm:$0xff] %v712
        %730 = vst [vmem:[#allocation2 + $0x18] sm:$0xff] %v713
        %731 = vst [vmem:[#allocation2 + $0x20] sm:$0xff] %v714
        %732 = vst [vmem:[#allocation2 + $0x28] sm:$0xff] %v715
        %733 = vst [vmem:[#allocation2 + $0x30] sm:$0xff] %v716
        %734 = vst [vmem:[#allocation2 + $0x38] sm:$0xff] %v717
        %735 = vst [vmem:[#allocation2 + $0x40] sm:$0xff] %v718
        %736 = vst [vmem:[#allocation2 + $0x48] sm:$0xff] %v719
        %737 = vst [vmem:[#allocation2 + $0x50] sm:$0xff] %v720
        %738 = vst [vmem:[#allocation2 + $0x58] sm:$0xff] %v721
        %739 = vst [vmem:[#allocation2 + $0x60] sm:$0xff] %v722
        %740 = vst [vmem:[#allocation2 + $0x68] sm:$0xff] %v723
        %741 = vst [vmem:[#allocation2 + $0x70] sm:$0xff] %v724
        %742 = vst [vmem:[#allocation2 + $0x78] sm:$0xff] %v725
        %743 = vst [vmem:[#allocation2 + $0x80] sm:$0xf] %v726
        %s744 = smul.u32 %s31, 128
        %p745 = scmp.lt.s32.totalorder %s744, 4
        // Predicated region
        $region65: #{tpu_custom_call.1} parent=47 // pred_check
          %p746 = pneg %p745
        $region66: #{tpu_custom_call.1} parent=47 // pred_check_branch
          %748 = sbr.rel (%p746) target = $region68
        $region67: #{tpu_custom_call.1} parent=47 // pred_region
          %v749 = vlaneseq
          %v750 = vshrl.u32 %v749, 7
          %v751 = vadd.s32 %v750, 8
          %v752 = vadd.s32 %v750, 16
          %v753 = vadd.s32 %v750, 24
          %v754 = vadd.s32 %v750, 32
          %v755 = vadd.s32 %v750, 40
          %v756 = vadd.s32 %v750, 48
          %v757 = vadd.s32 %v750, 56
          %v758 = vadd.s32 %v750, 64
          %v759 = vadd.s32 %v750, 72
          %v760 = vadd.s32 %v750, 80
          %v761 = vadd.s32 %v750, 88
          %v762 = vadd.s32 %v750, 96
          %v763 = vadd.s32 %v750, 104
          %v764 = vadd.s32 %v750, 112
          %v765 = vadd.s32 %v750, 120
          %v766 = vadd.s32 %v750, 128
          %v767 = vstv %s744
          %v768 = vadd.s32 %v750, %v767
          %v769 = vadd.s32 %v751, %v767
          %v770 = vadd.s32 %v752, %v767
          %v771 = vadd.s32 %v753, %v767
          %v772 = vadd.s32 %v754, %v767
          %v773 = vadd.s32 %v755, %v767
          %v774 = vadd.s32 %v756, %v767
          %v775 = vadd.s32 %v757, %v767
          %v776 = vadd.s32 %v758, %v767
          %v777 = vadd.s32 %v759, %v767
          %v778 = vadd.s32 %v760, %v767
          %v779 = vadd.s32 %v761, %v767
          %v780 = vadd.s32 %v762, %v767
          %v781 = vadd.s32 %v763, %v767
          %v782 = vadd.s32 %v764, %v767
          %v783 = vadd.s32 %v765, %v767
          %v784 = vadd.s32 %v766, %v767
          %vm785 = vcmp.lt.s32.totalorder %v768, 4
          %vm786 = vcmp.lt.s32.totalorder %v769, 4
          %vm787 = vcmp.lt.s32.totalorder %v770, 4
          %vm788 = vcmp.lt.s32.totalorder %v771, 4
          %vm789 = vcmp.lt.s32.totalorder %v772, 4
          %vm790 = vcmp.lt.s32.totalorder %v773, 4
          %vm791 = vcmp.lt.s32.totalorder %v774, 4
          %vm792 = vcmp.lt.s32.totalorder %v775, 4
          %vm793 = vcmp.lt.s32.totalorder %v776, 4
          %vm794 = vcmp.lt.s32.totalorder %v777, 4
          %vm795 = vcmp.lt.s32.totalorder %v778, 4
          %vm796 = vcmp.lt.s32.totalorder %v779, 4
          %vm797 = vcmp.lt.s32.totalorder %v780, 4
          %vm798 = vcmp.lt.s32.totalorder %v781, 4
          %vm799 = vcmp.lt.s32.totalorder %v782, 4
          %vm800 = vcmp.lt.s32.totalorder %v783, 4
          %vm801 = vcmp.lt.s32.totalorder %v784, 4
          %v802 = vld [vmem:[#allocation2] sm:$0xff]
          %v803 = vld [vmem:[#allocation2 + $0x8] sm:$0xff]
          %v804 = vld [vmem:[#allocation2 + $0x10] sm:$0xff]
          %v805 = vld [vmem:[#allocation2 + $0x18] sm:$0xff]
          %v806 = vld [vmem:[#allocation2 + $0x20] sm:$0xff]
          %v807 = vld [vmem:[#allocation2 + $0x28] sm:$0xff]
          %v808 = vld [vmem:[#allocation2 + $0x30] sm:$0xff]
          %v809 = vld [vmem:[#allocation2 + $0x38] sm:$0xff]
          %v810 = vld [vmem:[#allocation2 + $0x40] sm:$0xff]
          %v811 = vld [vmem:[#allocation2 + $0x48] sm:$0xff]
          %v812 = vld [vmem:[#allocation2 + $0x50] sm:$0xff]
          %v813 = vld [vmem:[#allocation2 + $0x58] sm:$0xff]
          %v814 = vld [vmem:[#allocation2 + $0x60] sm:$0xff]
          %v815 = vld [vmem:[#allocation2 + $0x68] sm:$0xff]
          %v816 = vld [vmem:[#allocation2 + $0x70] sm:$0xff]
          %v817 = vld [vmem:[#allocation2 + $0x78] sm:$0xff]
          %v818 = vld [vmem:[#allocation2 + $0x80] sm:$0xf]
          %v819 = vsel %vm785, 1, 0
          %v820 = vsel %vm786, 1, 0
          %v821 = vsel %vm787, 1, 0
          %v822 = vsel %vm788, 1, 0
          %v823 = vsel %vm789, 1, 0
          %v824 = vsel %vm790, 1, 0
          %v825 = vsel %vm791, 1, 0
          %v826 = vsel %vm792, 1, 0
          %v827 = vsel %vm793, 1, 0
          %v828 = vsel %vm794, 1, 0
          %v829 = vsel %vm795, 1, 0
          %v830 = vsel %vm796, 1, 0
          %v831 = vsel %vm797, 1, 0
          %v832 = vsel %vm798, 1, 0
          %v833 = vsel %vm799, 1, 0
          %v834 = vsel %vm800, 1, 0
          %v835 = vsel %vm801, 1, 0
          %vm836 = vcmp.eq.s32.totalorder %v819, 1
          %vm837 = vcmp.eq.s32.totalorder %v820, 1
          %vm838 = vcmp.eq.s32.totalorder %v821, 1
          %vm839 = vcmp.eq.s32.totalorder %v822, 1
          %vm840 = vcmp.eq.s32.totalorder %v823, 1
          %vm841 = vcmp.eq.s32.totalorder %v824, 1
          %vm842 = vcmp.eq.s32.totalorder %v825, 1
          %vm843 = vcmp.eq.s32.totalorder %v826, 1
          %vm844 = vcmp.eq.s32.totalorder %v827, 1
          %vm845 = vcmp.eq.s32.totalorder %v828, 1
          %vm846 = vcmp.eq.s32.totalorder %v829, 1
          %vm847 = vcmp.eq.s32.totalorder %v830, 1
          %vm848 = vcmp.eq.s32.totalorder %v831, 1
          %vm849 = vcmp.eq.s32.totalorder %v832, 1
          %vm850 = vcmp.eq.s32.totalorder %v833, 1
          %vm851 = vcmp.eq.s32.totalorder %v834, 1
          %vm852 = vcmp.eq.s32.totalorder %v835, 1
          %v853 = vsel %vm836, 0.0, %v802
          %v854 = vsel %vm837, 0.0, %v803
          %v855 = vsel %vm838, 0.0, %v804
          %v856 = vsel %vm839, 0.0, %v805
          %v857 = vsel %vm840, 0.0, %v806
          %v858 = vsel %vm841, 0.0, %v807
          %v859 = vsel %vm842, 0.0, %v808
          %v860 = vsel %vm843, 0.0, %v809
          %v861 = vsel %vm844, 0.0, %v810
          %v862 = vsel %vm845, 0.0, %v811
          %v863 = vsel %vm846, 0.0, %v812
          %v864 = vsel %vm847, 0.0, %v813
          %v865 = vsel %vm848, 0.0, %v814
          %v866 = vsel %vm849, 0.0, %v815
          %v867 = vsel %vm850, 0.0, %v816
          %v868 = vsel %vm851, 0.0, %v817
          %v869 = vsel %vm852, 0.0, %v818
          %870 = vst [vmem:[#allocation2] sm:$0xff] %v853
          %871 = vst [vmem:[#allocation2 + $0x8] sm:$0xff] %v854
          %872 = vst [vmem:[#allocation2 + $0x10] sm:$0xff] %v855
          %873 = vst [vmem:[#allocation2 + $0x18] sm:$0xff] %v856
          %874 = vst [vmem:[#allocation2 + $0x20] sm:$0xff] %v857
          %875 = vst [vmem:[#allocation2 + $0x28] sm:$0xff] %v858
          %876 = vst [vmem:[#allocation2 + $0x30] sm:$0xff] %v859
          %877 = vst [vmem:[#allocation2 + $0x38] sm:$0xff] %v860
          %878 = vst [vmem:[#allocation2 + $0x40] sm:$0xff] %v861
          %879 = vst [vmem:[#allocation2 + $0x48] sm:$0xff] %v862
          %880 = vst [vmem:[#allocation2 + $0x50] sm:$0xff] %v863
          %881 = vst [vmem:[#allocation2 + $0x58] sm:$0xff] %v864
          %882 = vst [vmem:[#allocation2 + $0x60] sm:$0xff] %v865
          %883 = vst [vmem:[#allocation2 + $0x68] sm:$0xff] %v866
          %884 = vst [vmem:[#allocation2 + $0x70] sm:$0xff] %v867
          %885 = vst [vmem:[#allocation2 + $0x78] sm:$0xff] %v868
          %886 = vst [vmem:[#allocation2 + $0x80] sm:$0xf] %v869
        $region68: #{tpu_custom_call.1} parent=47 // pred_fallthru
          _
        %v887 = vld [vmem:[#allocation2] sm:$0xff]
        %v888 = vld [vmem:[#allocation2 + $0x8] sm:$0xff]
        %v889 = vld [vmem:[#allocation2 + $0x10] sm:$0xff]
        %v890 = vld [vmem:[#allocation2 + $0x18] sm:$0xff]
        %v891 = vld [vmem:[#allocation2 + $0x20] sm:$0xff]
        %v892 = vld [vmem:[#allocation2 + $0x28] sm:$0xff]
        %v893 = vld [vmem:[#allocation2 + $0x30] sm:$0xff]
        %v894 = vld [vmem:[#allocation2 + $0x38] sm:$0xff]
        %v895 = vld [vmem:[#allocation2 + $0x40] sm:$0xff]
        %v896 = vld [vmem:[#allocation2 + $0x48] sm:$0xff]
        %v897 = vld [vmem:[#allocation2 + $0x50] sm:$0xff]
        %v898 = vld [vmem:[#allocation2 + $0x58] sm:$0xff]
        %v899 = vld [vmem:[#allocation2 + $0x60] sm:$0xff]
        %v900 = vld [vmem:[#allocation2 + $0x68] sm:$0xff]
        %v901 = vld [vmem:[#allocation2 + $0x70] sm:$0xff]
        %v902 = vld [vmem:[#allocation2 + $0x78] sm:$0xff]
        %v903 = vld [vmem:[#allocation8] sm:$0xff]
        %v904 = vld [vmem:[#allocation8 + $0x8] sm:$0xff]
        %v905 = vld [vmem:[#allocation8 + $0x10] sm:$0xff]
        %v906 = vld [vmem:[#allocation8 + $0x18] sm:$0xff]
        %v907 = vld [vmem:[#allocation8 + $0x20] sm:$0xff]
        %v908 = vld [vmem:[#allocation8 + $0x28] sm:$0xff]
        %v909 = vld [vmem:[#allocation8 + $0x30] sm:$0xff]
        %v910 = vld [vmem:[#allocation8 + $0x38] sm:$0xff]
        %v911 = vld [vmem:[#allocation8 + $0x40] sm:$0xff]
        %v912 = vld [vmem:[#allocation8 + $0x48] sm:$0xff]
        %v913 = vld [vmem:[#allocation8 + $0x50] sm:$0xff]
        %v914 = vld [vmem:[#allocation8 + $0x58] sm:$0xff]
        %v915 = vld [vmem:[#allocation8 + $0x60] sm:$0xff]
        %v916 = vld [vmem:[#allocation8 + $0x68] sm:$0xff]
        %v917 = vld [vmem:[#allocation8 + $0x70] sm:$0xff]
        %v918 = vld [vmem:[#allocation8 + $0x78] sm:$0xff]
        %v919 = vld [vmem:[#allocation2 + $0x2] sm:$0xff]
        %v920 = vld [vmem:[#allocation2 + $0xa] sm:$0xff]
        %v921 = vld [vmem:[#allocation2 + $0x12] sm:$0xff]
        %v922 = vld [vmem:[#allocation2 + $0x1a] sm:$0xff]
        %v923 = vld [vmem:[#allocation2 + $0x22] sm:$0xff]
        %v924 = vld [vmem:[#allocation2 + $0x2a] sm:$0xff]
        %v925 = vld [vmem:[#allocation2 + $0x32] sm:$0xff]
        %v926 = vld [vmem:[#allocation2 + $0x3a] sm:$0xff]
        %v927 = vld [vmem:[#allocation2 + $0x42] sm:$0xff]
        %v928 = vld [vmem:[#allocation2 + $0x4a] sm:$0xff]
        %v929 = vld [vmem:[#allocation2 + $0x52] sm:$0xff]
        %v930 = vld [vmem:[#allocation2 + $0x5a] sm:$0xff]
        %v931 = vld [vmem:[#allocation2 + $0x62] sm:$0xff]
        %v932 = vld [vmem:[#allocation2 + $0x6a] sm:$0xff]
        %v933 = vld [vmem:[#allocation2 + $0x72] sm:$0xff]
        %v934 = vld [vmem:[#allocation2 + $0x7a] sm:$0xff]
        %s935 = scalar_lea.vmem [#allocation8], 128
        %v936 = vld [vmem:[%s935] sm:$0xff]
        %v937 = vld [vmem:[%s935 + $0x8] sm:$0xff]
        %v938 = vld [vmem:[%s935 + $0x10] sm:$0xff]
        %v939 = vld [vmem:[%s935 + $0x18] sm:$0xff]
        %v940 = vld [vmem:[%s935 + $0x20] sm:$0xff]
        %v941 = vld [vmem:[%s935 + $0x28] sm:$0xff]
        %v942 = vld [vmem:[%s935 + $0x30] sm:$0xff]
        %v943 = vld [vmem:[%s935 + $0x38] sm:$0xff]
        %v944 = vld [vmem:[%s935 + $0x40] sm:$0xff]
        %v945 = vld [vmem:[%s935 + $0x48] sm:$0xff]
        %v946 = vld [vmem:[%s935 + $0x50] sm:$0xff]
        %v947 = vld [vmem:[%s935 + $0x58] sm:$0xff]
        %v948 = vld [vmem:[%s935 + $0x60] sm:$0xff]
        %v949 = vld [vmem:[%s935 + $0x68] sm:$0xff]
        %v950 = vld [vmem:[%s935 + $0x70] sm:$0xff]
        %v951 = vld [vmem:[%s935 + $0x78] sm:$0xff]
        %952 = vmatpush.msra.mxu0 %v951
        %953 = vmatpush.msra.mxu0 %v950
        %954 = vmatpush.msra.mxu0 %v949
        %955 = vmatpush.msra.mxu0 %v948
        %956 = vmatpush.msra.mxu0 %v947
        %957 = vmatpush.msra.mxu0 %v946
        %958 = vmatpush.msra.mxu0 %v945
        %959 = vmatpush.msra.mxu0 %v944
        %960 = vmatpush.msra.mxu0 %v943
        %961 = vmatpush.msra.mxu0 %v942
        %962 = vmatpush.msra.mxu0 %v941
        %963 = vmatpush.msra.mxu0 %v940
        %964 = vmatpush.msra.mxu0 %v939
        %965 = vmatpush.msra.mxu0 %v938
        %966 = vmatpush.msra.mxu0 %v937
        %967 = vmatpush.msra.mxu0 %v936
        %968 = vmatmul.f32.gmra.mxu0 %v919
        %v969 = vpop.f32.mrf.mxu0
        %v970 = vadd.f32 0.0, %v969
        %971 = vmatmul.f32.gmra.mxu0 %v920
        %v972 = vpop.f32.mrf.mxu0
        %v973 = vadd.f32 0.0, %v972
        %974 = vmatmul.f32.gmra.mxu0 %v921
        %v975 = vpop.f32.mrf.mxu0
        %v976 = vadd.f32 0.0, %v975
        %977 = vmatmul.f32.gmra.mxu0 %v922
        %v978 = vpop.f32.mrf.mxu0
        %v979 = vadd.f32 0.0, %v978
        %980 = vmatmul.f32.gmra.mxu0 %v923
        %v981 = vpop.f32.mrf.mxu0
        %v982 = vadd.f32 0.0, %v981
        %983 = vmatmul.f32.gmra.mxu0 %v924
        %v984 = vpop.f32.mrf.mxu0
        %v985 = vadd.f32 0.0, %v984
        %986 = vmatmul.f32.gmra.mxu0 %v925
        %v987 = vpop.f32.mrf.mxu0
        %v988 = vadd.f32 0.0, %v987
        %989 = vmatmul.f32.gmra.mxu0 %v926
        %v990 = vpop.f32.mrf.mxu0
        %v991 = vadd.f32 0.0, %v990
        %992 = vmatmul.f32.gmra.mxu0 %v927
        %v993 = vpop.f32.mrf.mxu0
        %v994 = vadd.f32 0.0, %v993
        %995 = vmatmul.f32.gmra.mxu0 %v928
        %v996 = vpop.f32.mrf.mxu0
        %v997 = vadd.f32 0.0, %v996
        %998 = vmatmul.f32.gmra.mxu0 %v929
        %v999 = vpop.f32.mrf.mxu0
        %v1000 = vadd.f32 0.0, %v999
        %1001 = vmatmul.f32.gmra.mxu0 %v930
        %v1002 = vpop.f32.mrf.mxu0
        %v1003 = vadd.f32 0.0, %v1002
        %1004 = vmatmul.f32.gmra.mxu0 %v931
        %v1005 = vpop.f32.mrf.mxu0
        %v1006 = vadd.f32 0.0, %v1005
        %1007 = vmatmul.f32.gmra.mxu0 %v932
        %v1008 = vpop.f32.mrf.mxu0
        %v1009 = vadd.f32 0.0, %v1008
        %1010 = vmatmul.f32.gmra.mxu0 %v933
        %v1011 = vpop.f32.mrf.mxu0
        %v1012 = vadd.f32 0.0, %v1011
        %1013 = vmatmul.f32.gmra.mxu0 %v934
        %v1014 = vpop.f32.mrf.mxu0
        %v1015 = vadd.f32 0.0, %v1014
        %1016 = vdwg.mxu0
        %1017 = vmatpush.msra.mxu0 %v918
        %1018 = vmatpush.msra.mxu0 %v917
        %1019 = vmatpush.msra.mxu0 %v916
        %1020 = vmatpush.msra.mxu0 %v915
        %1021 = vmatpush.msra.mxu0 %v914
        %1022 = vmatpush.msra.mxu0 %v913
        %1023 = vmatpush.msra.mxu0 %v912
        %1024 = vmatpush.msra.mxu0 %v911
        %1025 = vmatpush.msra.mxu0 %v910
        %1026 = vmatpush.msra.mxu0 %v909
        %1027 = vmatpush.msra.mxu0 %v908
        %1028 = vmatpush.msra.mxu0 %v907
        %1029 = vmatpush.msra.mxu0 %v906
        %1030 = vmatpush.msra.mxu0 %v905
        %1031 = vmatpush.msra.mxu0 %v904
        %1032 = vmatpush.msra.mxu0 %v903
        %1033 = vmatmul.f32.gmra.mxu0 %v887
        %v1034 = vpop.f32.mrf.mxu0
        %v1035 = vadd.f32 %v970, %v1034
        %1036 = vmatmul.f32.gmra.mxu0 %v888
        %v1037 = vpop.f32.mrf.mxu0
        %v1038 = vadd.f32 %v973, %v1037
        %1039 = vmatmul.f32.gmra.mxu0 %v889
        %v1040 = vpop.f32.mrf.mxu0
        %v1041 = vadd.f32 %v976, %v1040
        %1042 = vmatmul.f32.gmra.mxu0 %v890
        %v1043 = vpop.f32.mrf.mxu0
        %v1044 = vadd.f32 %v979, %v1043
        %1045 = vmatmul.f32.gmra.mxu0 %v891
        %v1046 = vpop.f32.mrf.mxu0
        %v1047 = vadd.f32 %v982, %v1046
        %1048 = vmatmul.f32.gmra.mxu0 %v892
        %v1049 = vpop.f32.mrf.mxu0
        %v1050 = vadd.f32 %v985, %v1049
        %1051 = vmatmul.f32.gmra.mxu0 %v893
        %v1052 = vpop.f32.mrf.mxu0
        %v1053 = vadd.f32 %v988, %v1052
        %1054 = vmatmul.f32.gmra.mxu0 %v894
        %v1055 = vpop.f32.mrf.mxu0
        %v1056 = vadd.f32 %v991, %v1055
        %1057 = vmatmul.f32.gmra.mxu0 %v895
        %v1058 = vpop.f32.mrf.mxu0
        %v1059 = vadd.f32 %v994, %v1058
        %1060 = vmatmul.f32.gmra.mxu0 %v896
        %v1061 = vpop.f32.mrf.mxu0
        %v1062 = vadd.f32 %v997, %v1061
        %1063 = vmatmul.f32.gmra.mxu0 %v897
        %v1064 = vpop.f32.mrf.mxu0
        %v1065 = vadd.f32 %v1000, %v1064
        %1066 = vmatmul.f32.gmra.mxu0 %v898
        %v1067 = vpop.f32.mrf.mxu0
        %v1068 = vadd.f32 %v1003, %v1067
        %1069 = vmatmul.f32.gmra.mxu0 %v899
        %v1070 = vpop.f32.mrf.mxu0
        %v1071 = vadd.f32 %v1006, %v1070
        %1072 = vmatmul.f32.gmra.mxu0 %v900
        %v1073 = vpop.f32.mrf.mxu0
        %v1074 = vadd.f32 %v1009, %v1073
        %1075 = vmatmul.f32.gmra.mxu0 %v901
        %v1076 = vpop.f32.mrf.mxu0
        %v1077 = vadd.f32 %v1012, %v1076
        %1078 = vmatmul.f32.gmra.mxu0 %v902
        %v1079 = vpop.f32.mrf.mxu0
        %v1080 = vadd.f32 %v1015, %v1079
        %1081 = vdwg.mxu0
        %v1082 = vld [vmem:[#allocation2 + $0x4] sm:$0xff]
        %v1083 = vld [vmem:[#allocation2 + $0xc] sm:$0xff]
        %v1084 = vld [vmem:[#allocation2 + $0x14] sm:$0xff]
        %v1085 = vld [vmem:[#allocation2 + $0x1c] sm:$0xff]
        %v1086 = vld [vmem:[#allocation2 + $0x24] sm:$0xff]
        %v1087 = vld [vmem:[#allocation2 + $0x2c] sm:$0xff]
        %v1088 = vld [vmem:[#allocation2 + $0x34] sm:$0xff]
        %v1089 = vld [vmem:[#allocation2 + $0x3c] sm:$0xff]
        %v1090 = vld [vmem:[#allocation2 + $0x44] sm:$0xff]
        %v1091 = vld [vmem:[#allocation2 + $0x4c] sm:$0xff]
        %v1092 = vld [vmem:[#allocation2 + $0x54] sm:$0xff]
        %v1093 = vld [vmem:[#allocation2 + $0x5c] sm:$0xff]
        %v1094 = vld [vmem:[#allocation2 + $0x64] sm:$0xff]
        %v1095 = vld [vmem:[#allocation2 + $0x6c] sm:$0xff]
        %v1096 = vld [vmem:[#allocation2 + $0x74] sm:$0xff]
        %v1097 = vld [vmem:[#allocation2 + $0x7c] sm:$0xff]
        %s1098 = scalar_lea.vmem [#allocation8], 256
        %v1099 = vld [vmem:[%s1098] sm:$0xff]
        %v1100 = vld [vmem:[%s1098 + $0x8] sm:$0xff]
        %v1101 = vld [vmem:[%s1098 + $0x10] sm:$0xff]
        %v1102 = vld [vmem:[%s1098 + $0x18] sm:$0xff]
        %v1103 = vld [vmem:[%s1098 + $0x20] sm:$0xff]
        %v1104 = vld [vmem:[%s1098 + $0x28] sm:$0xff]
        %v1105 = vld [vmem:[%s1098 + $0x30] sm:$0xff]
        %v1106 = vld [vmem:[%s1098 + $0x38] sm:$0xff]
        %v1107 = vld [vmem:[%s1098 + $0x40] sm:$0xff]
        %v1108 = vld [vmem:[%s1098 + $0x48] sm:$0xff]
        %v1109 = vld [vmem:[%s1098 + $0x50] sm:$0xff]
        %v1110 = vld [vmem:[%s1098 + $0x58] sm:$0xff]
        %v1111 = vld [vmem:[%s1098 + $0x60] sm:$0xff]
        %v1112 = vld [vmem:[%s1098 + $0x68] sm:$0xff]
        %v1113 = vld [vmem:[%s1098 + $0x70] sm:$0xff]
        %v1114 = vld [vmem:[%s1098 + $0x78] sm:$0xff]
        %1115 = vmatpush.msra.mxu0 %v1114
        %1116 = vmatpush.msra.mxu0 %v1113
        %1117 = vmatpush.msra.mxu0 %v1112
        %1118 = vmatpush.msra.mxu0 %v1111
        %1119 = vmatpush.msra.mxu0 %v1110
        %1120 = vmatpush.msra.mxu0 %v1109
        %1121 = vmatpush.msra.mxu0 %v1108
        %1122 = vmatpush.msra.mxu0 %v1107
        %1123 = vmatpush.msra.mxu0 %v1106
        %1124 = vmatpush.msra.mxu0 %v1105
        %1125 = vmatpush.msra.mxu0 %v1104
        %1126 = vmatpush.msra.mxu0 %v1103
        %1127 = vmatpush.msra.mxu0 %v1102
        %1128 = vmatpush.msra.mxu0 %v1101
        %1129 = vmatpush.msra.mxu0 %v1100
        %1130 = vmatpush.msra.mxu0 %v1099
        %1131 = vmatmul.f32.gmra.mxu0 %v1082
        %v1132 = vpop.f32.mrf.mxu0
        %v1133 = vadd.f32 0.0, %v1132
        %1134 = vmatmul.f32.gmra.mxu0 %v1083
        %v1135 = vpop.f32.mrf.mxu0
        %v1136 = vadd.f32 0.0, %v1135
        %1137 = vmatmul.f32.gmra.mxu0 %v1084
        %v1138 = vpop.f32.mrf.mxu0
        %v1139 = vadd.f32 0.0, %v1138
        %1140 = vmatmul.f32.gmra.mxu0 %v1085
        %v1141 = vpop.f32.mrf.mxu0
        %v1142 = vadd.f32 0.0, %v1141
        %1143 = vmatmul.f32.gmra.mxu0 %v1086
        %v1144 = vpop.f32.mrf.mxu0
        %v1145 = vadd.f32 0.0, %v1144
        %1146 = vmatmul.f32.gmra.mxu0 %v1087
        %v1147 = vpop.f32.mrf.mxu0
        %v1148 = vadd.f32 0.0, %v1147
        %1149 = vmatmul.f32.gmra.mxu0 %v1088
        %v1150 = vpop.f32.mrf.mxu0
        %v1151 = vadd.f32 0.0, %v1150
        %1152 = vmatmul.f32.gmra.mxu0 %v1089
        %v1153 = vpop.f32.mrf.mxu0
        %v1154 = vadd.f32 0.0, %v1153
        %1155 = vmatmul.f32.gmra.mxu0 %v1090
        %v1156 = vpop.f32.mrf.mxu0
        %v1157 = vadd.f32 0.0, %v1156
        %1158 = vmatmul.f32.gmra.mxu0 %v1091
        %v1159 = vpop.f32.mrf.mxu0
        %v1160 = vadd.f32 0.0, %v1159
        %1161 = vmatmul.f32.gmra.mxu0 %v1092
        %v1162 = vpop.f32.mrf.mxu0
        %v1163 = vadd.f32 0.0, %v1162
        %1164 = vmatmul.f32.gmra.mxu0 %v1093
        %v1165 = vpop.f32.mrf.mxu0
        %v1166 = vadd.f32 0.0, %v1165
        %1167 = vmatmul.f32.gmra.mxu0 %v1094
        %v1168 = vpop.f32.mrf.mxu0
        %v1169 = vadd.f32 0.0, %v1168
        %1170 = vmatmul.f32.gmra.mxu0 %v1095
        %v1171 = vpop.f32.mrf.mxu0
        %v1172 = vadd.f32 0.0, %v1171
        %1173 = vmatmul.f32.gmra.mxu0 %v1096
        %v1174 = vpop.f32.mrf.mxu0
        %v1175 = vadd.f32 0.0, %v1174
        %1176 = vmatmul.f32.gmra.mxu0 %v1097
        %v1177 = vpop.f32.mrf.mxu0
        %v1178 = vadd.f32 0.0, %v1177
        %1179 = vdwg.mxu0
        %v1180 = vadd.f32 %v1035, %v1133
        %v1181 = vadd.f32 %v1038, %v1136
        %v1182 = vadd.f32 %v1041, %v1139
        %v1183 = vadd.f32 %v1044, %v1142
        %v1184 = vadd.f32 %v1047, %v1145
        %v1185 = vadd.f32 %v1050, %v1148
        %v1186 = vadd.f32 %v1053, %v1151
        %v1187 = vadd.f32 %v1056, %v1154
        %v1188 = vadd.f32 %v1059, %v1157
        %v1189 = vadd.f32 %v1062, %v1160
        %v1190 = vadd.f32 %v1065, %v1163
        %v1191 = vadd.f32 %v1068, %v1166
        %v1192 = vadd.f32 %v1071, %v1169
        %v1193 = vadd.f32 %v1074, %v1172
        %v1194 = vadd.f32 %v1077, %v1175
        %v1195 = vadd.f32 %v1080, %v1178
        %v1196 = vld [vmem:[%s4] sm:$0x1]
        %v1198 = vperm.slane %v1196, 0
        %v1200 = vadd.f32 %v1180, %v1198
        %v1201 = vadd.f32 %v1181, %v1198
        %v1202 = vadd.f32 %v1182, %v1198
        %v1203 = vadd.f32 %v1183, %v1198
        %v1204 = vadd.f32 %v1184, %v1198
        %v1205 = vadd.f32 %v1185, %v1198
        %v1206 = vadd.f32 %v1186, %v1198
        %v1207 = vadd.f32 %v1187, %v1198
        %v1208 = vadd.f32 %v1188, %v1198
        %v1209 = vadd.f32 %v1189, %v1198
        %v1210 = vadd.f32 %v1190, %v1198
        %v1211 = vadd.f32 %v1191, %v1198
        %v1212 = vadd.f32 %v1192, %v1198
        %v1213 = vadd.f32 %v1193, %v1198
        %v1214 = vadd.f32 %v1194, %v1198
        %v1215 = vadd.f32 %v1195, %v1198
        %v1216 = vmax.f32 %v1200, 0.0
        %v1217 = vmax.f32 %v1201, 0.0
        %v1218 = vmax.f32 %v1202, 0.0
        %v1219 = vmax.f32 %v1203, 0.0
        %v1220 = vmax.f32 %v1204, 0.0
        %v1221 = vmax.f32 %v1205, 0.0
        %v1222 = vmax.f32 %v1206, 0.0
        %v1223 = vmax.f32 %v1207, 0.0
        %v1224 = vmax.f32 %v1208, 0.0
        %v1225 = vmax.f32 %v1209, 0.0
        %v1226 = vmax.f32 %v1210, 0.0
        %v1227 = vmax.f32 %v1211, 0.0
        %v1228 = vmax.f32 %v1212, 0.0
        %v1229 = vmax.f32 %v1213, 0.0
        %v1230 = vmax.f32 %v1214, 0.0
        %v1231 = vmax.f32 %v1215, 0.0
        %v1232 = vld [vmem:[%s320 + $0x8] sm:$0xff]
        %v1233 = vld [vmem:[%s320 + $0x10] sm:$0xff]
        %v1234 = vld [vmem:[%s320 + $0x18] sm:$0xff]
        %v1235 = vld [vmem:[%s320 + $0x20] sm:$0xff]
        %v1236 = vld [vmem:[%s320 + $0x28] sm:$0xff]
        %v1237 = vld [vmem:[%s320 + $0x30] sm:$0xff]
        %v1238 = vld [vmem:[%s320 + $0x38] sm:$0xff]
        %v1239 = vld [vmem:[%s320 + $0x40] sm:$0xff]
        %v1240 = vld [vmem:[%s320 + $0x48] sm:$0xff]
        %v1241 = vld [vmem:[%s320 + $0x50] sm:$0xff]
        %v1242 = vld [vmem:[%s320 + $0x58] sm:$0xff]
        %v1243 = vld [vmem:[%s320 + $0x60] sm:$0xff]
        %v1244 = vld [vmem:[%s320 + $0x68] sm:$0xff]
        %v1245 = vld [vmem:[%s320 + $0x70] sm:$0xff]
        %v1246 = vld [vmem:[%s320 + $0x78] sm:$0xff]
        %v1247 = vld [vmem:[%s320 + $0x80] sm:$0xff]
        %v1248 = vld [vmem:[#allocation9] sm:$0xff]
        %v1249 = vld [vmem:[#allocation9 + $0x8] sm:$0xff]
        %v1250 = vld [vmem:[#allocation9 + $0x10] sm:$0xff]
        %v1251 = vld [vmem:[#allocation9 + $0x18] sm:$0xff]
        %v1252 = vld [vmem:[#allocation9 + $0x20] sm:$0xff]
        %v1253 = vld [vmem:[#allocation9 + $0x28] sm:$0xff]
        %v1254 = vld [vmem:[#allocation9 + $0x30] sm:$0xff]
        %v1255 = vld [vmem:[#allocation9 + $0x38] sm:$0xff]
        %v1256 = vld [vmem:[#allocation9 + $0x40] sm:$0xff]
        %v1257 = vld [vmem:[#allocation9 + $0x48] sm:$0xff]
        %v1258 = vld [vmem:[#allocation9 + $0x50] sm:$0xff]
        %v1259 = vld [vmem:[#allocation9 + $0x58] sm:$0xff]
        %v1260 = vld [vmem:[#allocation9 + $0x60] sm:$0xff]
        %v1261 = vld [vmem:[#allocation9 + $0x68] sm:$0xff]
        %v1262 = vld [vmem:[#allocation9 + $0x70] sm:$0xff]
        %v1263 = vld [vmem:[#allocation9 + $0x78] sm:$0xff]
        %v1264 = vld [vmem:[%s6] sm:$0x1]
        %v1266 = vperm.slane %v1264, 0
        %1268 = vmatpush.msra.mxu0 %v1263
        %1269 = vmatpush.msra.mxu0 %v1262
        %1270 = vmatpush.msra.mxu0 %v1261
        %1271 = vmatpush.msra.mxu0 %v1260
        %1272 = vmatpush.msra.mxu0 %v1259
        %1273 = vmatpush.msra.mxu0 %v1258
        %1274 = vmatpush.msra.mxu0 %v1257
        %1275 = vmatpush.msra.mxu0 %v1256
        %1276 = vmatpush.msra.mxu0 %v1255
        %1277 = vmatpush.msra.mxu0 %v1254
        %1278 = vmatpush.msra.mxu0 %v1253
        %1279 = vmatpush.msra.mxu0 %v1252
        %1280 = vmatpush.msra.mxu0 %v1251
        %1281 = vmatpush.msra.mxu0 %v1250
        %1282 = vmatpush.msra.mxu0 %v1249
        %1283 = vmatpush.msra.mxu0 %v1248
        %1284 = vmatmul.f32.gmra.mxu0 %v1232
        %v1285 = vpop.f32.mrf.mxu0
        %v1286 = vadd.f32 %v1266, %v1285
        %1287 = vmatmul.f32.gmra.mxu0 %v1233
        %v1288 = vpop.f32.mrf.mxu0
        %v1289 = vadd.f32 %v1266, %v1288
        %1290 = vmatmul.f32.gmra.mxu0 %v1234
        %v1291 = vpop.f32.mrf.mxu0
        %v1292 = vadd.f32 %v1266, %v1291
        %1293 = vmatmul.f32.gmra.mxu0 %v1235
        %v1294 = vpop.f32.mrf.mxu0
        %v1295 = vadd.f32 %v1266, %v1294
        %1296 = vmatmul.f32.gmra.mxu0 %v1236
        %v1297 = vpop.f32.mrf.mxu0
        %v1298 = vadd.f32 %v1266, %v1297
        %1299 = vmatmul.f32.gmra.mxu0 %v1237
        %v1300 = vpop.f32.mrf.mxu0
        %v1301 = vadd.f32 %v1266, %v1300
        %1302 = vmatmul.f32.gmra.mxu0 %v1238
        %v1303 = vpop.f32.mrf.mxu0
        %v1304 = vadd.f32 %v1266, %v1303
        %1305 = vmatmul.f32.gmra.mxu0 %v1239
        %v1306 = vpop.f32.mrf.mxu0
        %v1307 = vadd.f32 %v1266, %v1306
        %1308 = vmatmul.f32.gmra.mxu0 %v1240
        %v1309 = vpop.f32.mrf.mxu0
        %v1310 = vadd.f32 %v1266, %v1309
        %1311 = vmatmul.f32.gmra.mxu0 %v1241
        %v1312 = vpop.f32.mrf.mxu0
        %v1313 = vadd.f32 %v1266, %v1312
        %1314 = vmatmul.f32.gmra.mxu0 %v1242
        %v1315 = vpop.f32.mrf.mxu0
        %v1316 = vadd.f32 %v1266, %v1315
        %1317 = vmatmul.f32.gmra.mxu0 %v1243
        %v1318 = vpop.f32.mrf.mxu0
        %v1319 = vadd.f32 %v1266, %v1318
        %1320 = vmatmul.f32.gmra.mxu0 %v1244
        %v1321 = vpop.f32.mrf.mxu0
        %v1322 = vadd.f32 %v1266, %v1321
        %1323 = vmatmul.f32.gmra.mxu0 %v1245
        %v1324 = vpop.f32.mrf.mxu0
        %v1325 = vadd.f32 %v1266, %v1324
        %1326 = vmatmul.f32.gmra.mxu0 %v1246
        %v1327 = vpop.f32.mrf.mxu0
        %v1328 = vadd.f32 %v1266, %v1327
        %1329 = vmatmul.f32.gmra.mxu0 %v1247
        %v1330 = vpop.f32.mrf.mxu0
        %v1331 = vadd.f32 %v1266, %v1330
        %1332 = vdwg.mxu0
        %v1333 = vadd.f32 %v1216, %v1286
        %v1334 = vadd.f32 %v1217, %v1289
        %v1335 = vadd.f32 %v1218, %v1292
        %v1336 = vadd.f32 %v1219, %v1295
        %v1337 = vadd.f32 %v1220, %v1298
        %v1338 = vadd.f32 %v1221, %v1301
        %v1339 = vadd.f32 %v1222, %v1304
        %v1340 = vadd.f32 %v1223, %v1307
        %v1341 = vadd.f32 %v1224, %v1310
        %v1342 = vadd.f32 %v1225, %v1313
        %v1343 = vadd.f32 %v1226, %v1316
        %v1344 = vadd.f32 %v1227, %v1319
        %v1345 = vadd.f32 %v1228, %v1322
        %v1346 = vadd.f32 %v1229, %v1325
        %v1347 = vadd.f32 %v1230, %v1328
        %v1348 = vadd.f32 %v1231, %v1331
        %v1349 = vmax.f32 %v1333, 0.0
        %v1350 = vmax.f32 %v1334, 0.0
        %v1351 = vmax.f32 %v1335, 0.0
        %v1352 = vmax.f32 %v1336, 0.0
        %v1353 = vmax.f32 %v1337, 0.0
        %v1354 = vmax.f32 %v1338, 0.0
        %v1355 = vmax.f32 %v1339, 0.0
        %v1356 = vmax.f32 %v1340, 0.0
        %v1357 = vmax.f32 %v1341, 0.0
        %v1358 = vmax.f32 %v1342, 0.0
        %v1359 = vmax.f32 %v1343, 0.0
        %v1360 = vmax.f32 %v1344, 0.0
        %v1361 = vmax.f32 %v1345, 0.0
        %v1362 = vmax.f32 %v1346, 0.0
        %v1363 = vmax.f32 %v1347, 0.0
        %v1364 = vmax.f32 %v1348, 0.0
        %1365 = vxpose.xlu0.b32.start [1/16] %v1349, 128
        %1366 = vxpose.xlu0.b32.cont [2/16] %v1350, 128
        %1367 = vxpose.xlu0.b32.cont [3/16] %v1351, 128
        %1368 = vxpose.xlu0.b32.cont [4/16] %v1352, 128
        %1369 = vxpose.xlu0.b32.cont [5/16] %v1353, 128
        %1370 = vxpose.xlu0.b32.cont [6/16] %v1354, 128
        %1371 = vxpose.xlu0.b32.cont [7/16] %v1355, 128
        %1372 = vxpose.xlu0.b32.cont [8/16] %v1356, 128
        %1373 = vxpose.xlu0.b32.cont [9/16] %v1357, 128
        %1374 = vxpose.xlu0.b32.cont [10/16] %v1358, 128
        %1375 = vxpose.xlu0.b32.cont [11/16] %v1359, 128
        %1376 = vxpose.xlu0.b32.cont [12/16] %v1360, 128
        %1377 = vxpose.xlu0.b32.cont [13/16] %v1361, 128
        %1378 = vxpose.xlu0.b32.cont [14/16] %v1362, 128
        %1379 = vxpose.xlu0.b32.cont [15/16] %v1363, 128
        %1380 = vxpose.xlu0.b32.end [16/16] %v1364, 128
        %v1381 = vpop.trf.xlu0
        %v1382 = vpop.trf.xlu0
        %v1383 = vpop.trf.xlu0
        %v1384 = vpop.trf.xlu0
        %v1385 = vpop.trf.xlu0
        %v1386 = vpop.trf.xlu0
        %v1387 = vpop.trf.xlu0
        %v1388 = vpop.trf.xlu0
        %v1389 = vpop.trf.xlu0
        %v1390 = vpop.trf.xlu0
        %v1391 = vpop.trf.xlu0
        %v1392 = vpop.trf.xlu0
        %v1393 = vpop.trf.xlu0
        %v1394 = vpop.trf.xlu0
        %v1395 = vpop.trf.xlu0
        %v1396 = vpop.trf.xlu0
        %1397 = vst [vmem:[%s366] sm:$0xff] %v1381
        %1398 = vst [vmem:[%s366 + $0x8] sm:$0xff] %v1382
        %1399 = vst [vmem:[%s366 + $0x10] sm:$0xff] %v1383
        %1400 = vst [vmem:[%s366 + $0x18] sm:$0xff] %v1384
        %1401 = vst [vmem:[%s366 + $0x20] sm:$0xff] %v1385
        %1402 = vst [vmem:[%s366 + $0x28] sm:$0xff] %v1386
        %1403 = vst [vmem:[%s366 + $0x30] sm:$0xff] %v1387
        %1404 = vst [vmem:[%s366 + $0x38] sm:$0xff] %v1388
        %1405 = vst [vmem:[%s366 + $0x40] sm:$0xff] %v1389
        %1406 = vst [vmem:[%s366 + $0x48] sm:$0xff] %v1390
        %1407 = vst [vmem:[%s366 + $0x50] sm:$0xff] %v1391
        %1408 = vst [vmem:[%s366 + $0x58] sm:$0xff] %v1392
        %1409 = vst [vmem:[%s366 + $0x60] sm:$0xff] %v1393
        %1410 = vst [vmem:[%s366 + $0x68] sm:$0xff] %v1394
        %1411 = vst [vmem:[%s366 + $0x70] sm:$0xff] %v1395
        %1412 = vst [vmem:[%s366 + $0x78] sm:$0xff] %v1396
        %s1413 = sand.u32 %s202, 1
        %s1414 = scalar_lea.sflag [#allocation5], %s1413
        %s1415 = sand.u32 %s202, 1
        %s1416 = smul.addr %s1415, 128
        %s1417 = scalar_lea.vmem [#allocation11], %s1416
        // Predicated region
        $region69: #{tpu_custom_call.1} parent=47 // pred_check
          %p1418 = pneg %p212
        $region70: #{tpu_custom_call.1} parent=47 // pred_check_branch
          %1420 = sbr.rel (%p1418) target = $region72
        $region71: #{tpu_custom_call.1} parent=47 // pred_region
          %1422 = vsyncadd %s1414, 0
          %s1423 = smul.addr %s30, 16
          %s1424 = sadd.s32 %s31, %s1423
          %s1425 = smul.addr %s1424, 8
          %s1426 = scalar_lea.hbm %s7, %s1425
          %s1427 = sshll.u32 %s1417, 4
          %s1428 = int_to_ptr.vmem [resolvable:$true] %s1427
          %s1429 = sshll.u32 %s1426, 4
          %s1430 = int_to_ptr.hbm [resolvable:$true] %s1429
          %1435 = dma.vmem_to_hbm [thread:$0]  %s1428, 2048, %s1430, %s1414, 128, 128, 8
        $region72: #{tpu_custom_call.1} parent=47 // pred_fallthru
          _
      $region48: #{tpu_custom_call.1} parent=5 // pred_fallthru
        _
      %p1436 = scmp.le.s32.totalorder 2, %s21
      // Predicated region
      $region73: #{tpu_custom_call.1} parent=5 // pred_check
        %p1437 = pneg %p1436
      $region74: #{tpu_custom_call.1} parent=5 // pred_check_branch
        %1439 = sbr.rel (%p1437) target = $region76
      $region75: #{tpu_custom_call.1} parent=5 // pred_region
        %s1440 = ssub.s32 %s21, 2
        // Predicated region
        $region77: #{tpu_custom_call.1} parent=75 // pred_check
          %p1441 = pneg %p218
        $region78: #{tpu_custom_call.1} parent=75 // pred_check_branch
          %1443 = sbr.rel (%p1441) target = $region80
        $region79: #{tpu_custom_call.1} parent=75 // pred_region
          %s1444 = sand.u32 %s203, 1
          %s1445 = scalar_lea.sflag [#allocation5], %s1444
          %s1446 = sand.u32 %s203, 1
          %s1447 = smul.addr %s1446, 128
          %s1448 = scalar_lea.vmem [#allocation11], %s1447
          %1450 = dma.done %s1445, 2048
        $region80: #{tpu_custom_call.1} parent=75 // pred_fallthru
          _
      $region76: #{tpu_custom_call.1} parent=5 // pred_fallthru
        _
    $region6: #{tpu_custom_call.1} parent=1 // loop_footer
      %s25 = sadd.s32 1, %s21
    $region7: #{tpu_custom_call.1} parent=1 // loop_footer_branch
      %20 = sbr.rel target = $region3
    $region8: #{tpu_custom_call.1} parent=1 // loop_exit
      _
    %1451 = vsyncpa [#allocation4], 1
    %s1452 = scalar_lea.sflag [#allocation4], 1
    %1453 = vsyncpa %s1452, 1
    %1454 = vsyncpa [#allocation7], 1
    %1455 = vsyncpa [#allocation10], 1
    %1456 = vsyncpa [#allocation5], 1
    %s1457 = scalar_lea.sflag [#allocation5], 1
    %1458 = vsyncpa %s1457, 1

</llo_original>
